<compile_context>
chip_gen: v7x
topology: tpu7x:2x2x1
jax: 0.10.0
libtpu: 0.0.40
codegen_flags: <defaults>
</compile_context>

<pallas_src>
import functools

import jax
import jax.numpy as jnp
from jax.experimental import pallas as pl
from jax.experimental.pallas import tpu as pltpu

# ---- problem sizes (small, consistent with the module's __init__ signature) ----
B = 4            # graphs per pallas_call (grid axis)
N = 16           # nodes per graph
IN_FEATS = 16    # dim of g.ndata['_CODEBERT'] (kept small for the synthetic kernel)
HIDDEN = 8       # hidden_feats
HEADS = 4        # num_heads of gat1 (gat2 has 1 head)
NEG_SLOPE = 0.2  # DGL GATConv LeakyReLU default
NEG_INF = -1e9
LANES = 128      # lane width of the packed weight slab and of the output block


def _leaky_relu(x):
    return jnp.where(x > 0, x, NEG_SLOPE * x)


# --------------------------- weight slab packing (host side) ---------------------------
def _pack_slab(parts):
    """parts: [(name, 2-D f32 array)] -> (slab (R, 128) f32, {name: (row_off, rows, cols)}).

    Every block starts on an 8-row boundary so in-kernel static ref slices are tile-aligned.
    """
    blocks, index, off = [], {}, 0
    for name, arr in parts:
        arr = jnp.asarray(arr, jnp.float32)
        r, c = arr.shape
        rpad = ((r + 7) // 8) * 8
        blocks.append(jnp.zeros((rpad, LANES), jnp.float32).at[:r, :c].set(arr))
        index[name] = (off, r, c)
        off += rpad
    return jnp.concatenate(blocks, axis=0), index


# --------------------------------- the fused kernel ---------------------------------
def _make_kernel(widx):
    """Builds the per-graph kernel; `widx` holds static row offsets into the weight slab."""

    def _w(w_ref, name):
        off, r, c = widx[name]
        return w_ref[off:off + r, 0:c]

    def kernel(x_ref, mask_ref, w_ref, out_ref):
        f32 = jnp.float32
        x = x_ref[0].astype(f32)        # (N, IN_FEATS)   h = g.ndata['_CODEBERT'].float()
        mask = mask_ref[0]              # (N, N) additive mask: 0 on edges, -1e9 elsewhere

        w1 = _w(w_ref, "w1")            # (IN_FEATS, H*F)  gat1.fc (pre-transposed, x @ W)
        attn1 = _w(w_ref, "attn1")      # (H*F, 2H)        [attn_l blocks | attn_r blocks]
        b1 = _w(w_ref, "b1")            # (1, H*F)
        hmask = _w(w_ref, "hmask")      # (H, H*F)         block-diagonal column selector
        hsel = _w(w_ref, "hsel")        # (H*N, H)         head   -> stacked rows selector
        lsel = _w(w_ref, "lsel")        # (H*N, N)         dst id -> stacked rows selector
        w2 = _w(w_ref, "w2")            # (H*F, F)         gat2.fc
        attn2 = _w(w_ref, "attn2")      # (F, 2)           [attn_l | attn_r]
        b2 = _w(w_ref, "b2")            # (1, F)
        readout = _w(w_ref, "readout")  # (N+1, N)         [I_N ; 1/N row]  (mean_nodes)
        mw1 = _w(w_ref, "mlp_w1")       # (F, 2F)          [node_mlp.0 | graph_mlp.0]
        mb1 = _w(w_ref, "mlp_b1")       # (1, 2F)
        mw2 = _w(w_ref, "mlp_w2")       # (2F, 128)        node_mlp.3 -> cols 0:2, graph -> 2:4
        mb2 = _w(w_ref, "mlp_b2")       # (1, 128)

        # ------------------------- gat1 (HEADS heads) -> .flatten(1) -------------------------
        feat1 = jnp.dot(x, w1, preferred_element_type=f32)            # (N, H*F)
        elr1 = jnp.dot(feat1, attn1, preferred_element_type=f32)      # (N, 2H): [el | er]
        elr1_t = jnp.transpose(elr1)                                  # (2H, N)  (one tiny vxpose)
        el1 = elr1_t[0:HEADS, :]                                      # (H, N): el[h, src]
        er1 = elr1_t[HEADS:2 * HEADS, :]                              # (H, N): er[h, dst]

        # One stacked softmax chain for all heads: rows = (head, dst), lanes = src.
        el_b = jnp.dot(hsel, el1, preferred_element_type=f32)         # (H*N, N): el[h, u]
        er_rep = jnp.dot(hsel, er1, preferred_element_type=f32)       # (H*N, N): er[h, u]
        er_col = jnp.sum(er_rep * lsel, axis=1, keepdims=True)        # (H*N, 1): er[h, v]
        mask_rep = jnp.dot(lsel, mask, preferred_element_type=f32)    # (H*N, N): mask[v, u]
        e = _leaky_relu(er_col + el_b) + mask_rep                     # (H*N, N)
        e = e - jnp.max(e, axis=1, keepdims=True)
        p = jnp.exp(e)        # masked entries underflow to exactly 0 (self-loop precondition)
        alpha = p * pl.reciprocal(jnp.sum(p, axis=1, keepdims=True), approx=True)

        # One fused MXU push for all heads; keep only the block-diagonal column groups.
        agg = jnp.dot(alpha, feat1, preferred_element_type=f32)       # (H*N, H*F)
        h1 = agg[0:N, :] * hmask[0:1, :]
        for h in range(1, HEADS):
            h1 = h1 + agg[h * N:(h + 1) * N, :] * hmask[h:h + 1, :]
        h1 = h1 + b1                                                  # (N, H*F)

        # ------------------------- gat2 (1 head) -> .squeeze(1) -------------------------
        feat2 = jnp.dot(h1, w2, preferred_element_type=f32)           # (N, F)
        elr2 = jnp.dot(feat2, attn2, preferred_element_type=f32)      # (N, 2): [el | er]
        el2 = jnp.transpose(elr2)[0:1, :]                             # (1, N): el[src]
        er2 = elr2[:, 1:2]                                            # (N, 1): er[dst]
        e2 = _leaky_relu(er2 + el2) + mask
        e2 = e2 - jnp.max(e2, axis=1, keepdims=True)
        p2 = jnp.exp(e2)
        alpha2 = p2 * pl.reciprocal(jnp.sum(p2, axis=1, keepdims=True), approx=True)
        h2 = jnp.dot(alpha2, feat2, preferred_element_type=f32) + b2  # (N, F)

        # ---------- mean_nodes readout + fused node/graph MLP heads (Dropout = id) ----------
        hc = jnp.dot(readout, h2, preferred_element_type=f32)         # (N+1, F) = [h2 ; mean(h2)]
        hid = jnp.maximum(jnp.dot(hc, mw1, preferred_element_type=f32) + mb1, 0.0)
        logits = jnp.dot(hid, mw2, preferred_element_type=f32) + mb2  # (N+1, 128) lane-dense
        out_ref[0] = logits

    return kernel


# ------------------------------------ wrapper ------------------------------------
def multitask_gat_forward(x, mask_add, slab, widx):
    """x: (B, N, IN_FEATS); mask_add: (B, N, N) additive adjacency mask; slab: packed weights."""
    b, n, _ = x.shape
    rows = slab.shape[0]
    out = pl.pallas_call(
        _make_kernel(widx),
        out_shape=jax.ShapeDtypeStruct((b, n + 1, LANES), jnp.float32),
        grid=(b,),
        in_specs=[
            pl.BlockSpec((1, n, IN_FEATS), lambda i: (i, 0, 0)),   # per-graph node features
            pl.BlockSpec((1, n, n), lambda i: (i, 0, 0)),          # per-graph additive mask
            pl.BlockSpec((rows, LANES), lambda i: (0, 0)),         # weights: VMEM-resident
        ],
        out_specs=pl.BlockSpec((1, n + 1, LANES), lambda i: (i, 0, 0)),
        compiler_params=pltpu.CompilerParams(
            dimension_semantics=("parallel",),   # shard the graph axis across TCs (v7x)
        ),
    )(x, mask_add, slab)
    node_logits = out[:, :n, 0:2]    # rows 0..N-1, node_mlp columns
    graph_logits = out[:, n, 2:4]    # row N (mean readout), graph_mlp columns
    return node_logits, graph_logits


# ------------------------------ parameters & packing ------------------------------
def make_params(key):
    ks = jax.random.split(key, 16)
    s = 0.1
    HF = HEADS * HIDDEN
    return {
        "w1": s * jax.random.normal(ks[0], (IN_FEATS, HF), jnp.float32),
        "attn_l1": s * jax.random.normal(ks[1], (HEADS, HIDDEN), jnp.float32),
        "attn_r1": s * jax.random.normal(ks[2], (HEADS, HIDDEN), jnp.float32),
        "b1": s * jax.random.normal(ks[3], (1, HF), jnp.float32),
        "w2": s * jax.random.normal(ks[4], (HF, HIDDEN), jnp.float32),
        "attn_l2": s * jax.random.normal(ks[5], (1, HIDDEN), jnp.float32),
        "attn_r2": s * jax.random.normal(ks[6], (1, HIDDEN), jnp.float32),
        "b2": s * jax.random.normal(ks[7], (1, HIDDEN), jnp.float32),
        "nw1": s * jax.random.normal(ks[8], (HIDDEN, HIDDEN), jnp.float32),
        "nb1": s * jax.random.normal(ks[9], (1, HIDDEN), jnp.float32),
        "nw2": s * jax.random.normal(ks[10], (HIDDEN, 2), jnp.float32),
        "nb2": s * jax.random.normal(ks[11], (1, 2), jnp.float32),
        "gw1": s * jax.random.normal(ks[12], (HIDDEN, HIDDEN), jnp.float32),
        "gb1": s * jax.random.normal(ks[13], (1, HIDDEN), jnp.float32),
        "gw2": s * jax.random.normal(ks[14], (HIDDEN, 2), jnp.float32),
        "gb2": s * jax.random.normal(ks[15], (1, 2), jnp.float32),
    }


def _head_block_cols(attn):
    """(H, F) -> (H*F, H): column h carries attn[h] over rows [h*F, (h+1)*F), zeros elsewhere."""
    h, f = attn.shape
    eye = jnp.eye(h, dtype=attn.dtype)
    return (eye[:, :, None] * attn[:, None, :]).reshape(h, h * f).T


def build_slab(p):
    attn1 = jnp.concatenate(
        [_head_block_cols(p["attn_l1"]), _head_block_cols(p["attn_r1"])], axis=1)  # (H*F, 2H)
    attn2 = jnp.concatenate([p["attn_l2"].T, p["attn_r2"].T], axis=1)              # (F, 2)
    hmask = jnp.kron(jnp.eye(HEADS, dtype=jnp.float32), jnp.ones((1, HIDDEN), jnp.float32))
    hsel = jnp.kron(jnp.eye(HEADS, dtype=jnp.float32), jnp.ones((N, 1), jnp.float32))
    lsel = jnp.kron(jnp.ones((HEADS, 1), jnp.float32), jnp.eye(N, dtype=jnp.float32))
    readout = jnp.concatenate(
        [jnp.eye(N, dtype=jnp.float32), jnp.full((1, N), 1.0 / N, jnp.float32)], axis=0)
    mlp_w1 = jnp.concatenate([p["nw1"], p["gw1"]], axis=1)                          # (F, 2F)
    mlp_b1 = jnp.concatenate([p["nb1"], p["gb1"]], axis=1)                          # (1, 2F)
    mlp_w2 = (jnp.zeros((2 * HIDDEN, LANES), jnp.float32)
              .at[0:HIDDEN, 0:2].set(p["nw2"])
              .at[HIDDEN:2 * HIDDEN, 2:4].set(p["gw2"]))
    mlp_b2 = (jnp.zeros((1, LANES), jnp.float32)
              .at[:, 0:2].set(p["nb2"]).at[:, 2:4].set(p["gb2"]))
    parts = [
        ("w1", p["w1"]), ("attn1", attn1), ("b1", p["b1"]), ("hmask", hmask),
        ("hsel", hsel), ("lsel", lsel),
        ("w2", p["w2"]), ("attn2", attn2), ("b2", p["b2"]),
        ("readout", readout),
        ("mlp_w1", mlp_w1), ("mlp_b1", mlp_b1), ("mlp_w2", mlp_w2), ("mlp_b2", mlp_b2),
    ]
    return _pack_slab(parts)


# --------------------------- pure-JAX reference (for checking) ---------------------------
def _ref_gat(feat, adj, attn_l, attn_r, bias, num_heads, out_feats):
    outs = []
    for h in range(num_heads):
        fh = feat[:, h * out_feats:(h + 1) * out_feats]
        el = fh @ attn_l[h][:, None]                 # (N, 1) source term
        er = fh @ attn_r[h][:, None]                 # (N, 1) dest term
        e = _leaky_relu(er + el.T)                   # e[v, u] = er[v] + el[u]
        e = jnp.where(adj > 0, e, NEG_INF)
        e = e - jnp.max(e, axis=1, keepdims=True)
        p = jnp.where(adj > 0, jnp.exp(e), 0.0)
        alpha = p / jnp.sum(p, axis=1, keepdims=True)
        outs.append(alpha @ fh)
    return jnp.concatenate(outs, axis=1) + bias


def reference_forward(x, adj, p):
    feat1 = x @ p["w1"]
    h1 = _ref_gat(feat1, adj, p["attn_l1"], p["attn_r1"], p["b1"], HEADS, HIDDEN)
    feat2 = h1 @ p["w2"]
    h2 = _ref_gat(feat2, adj, p["attn_l2"], p["attn_r2"], p["b2"], 1, HIDDEN)
    hn = jax.nn.relu(h2 @ p["nw1"] + p["nb1"])
    node_logits = hn @ p["nw2"] + p["nb2"]
    hg = jnp.mean(h2, axis=0, keepdims=True)
    hgm = jax.nn.relu(hg @ p["gw1"] + p["gb1"])
    graph_logits = hgm @ p["gw2"] + p["gb2"]
    return node_logits, graph_logits[0]


if __name__ == "__main__":
    key = jax.random.PRNGKey(0)
    kx, kp = jax.random.split(key)

    # node features per graph (stand-in for g.ndata['_CODEBERT'])
    x = jax.random.normal(kx, (B, N, IN_FEATS), jnp.float32)

    # deterministic per-graph adjacency: self-loops (required precondition) + ring + one chord
    # adj[g, v, u] = 1 iff edge u -> v
    idx = jnp.arange(N)
    adj = jnp.stack([
        (jnp.zeros((N, N), jnp.float32)
         .at[idx, idx].set(1.0)
         .at[idx, (idx - 1) % N].set(1.0)
         .at[idx, (idx + g + 1) % N].set(1.0))
        for g in range(B)
    ], axis=0)
    mask_add = jnp.where(adj > 0, 0.0, NEG_INF).astype(jnp.float32)

    params = make_params(kp)
    slab, widx = build_slab(params)

    fwd = jax.jit(functools.partial(multitask_gat_forward, widx=widx))
    node_logits, graph_logits = fwd(x, mask_add, slab)
    jax.block_until_ready((node_logits, graph_logits))

    ref_nodes = jnp.stack([reference_forward(x[g], adj[g], params)[0] for g in range(B)])
    ref_graphs = jnp.stack([reference_forward(x[g], adj[g], params)[1] for g in range(B)])

    assert node_logits.shape == (B, N, 2) and graph_logits.shape == (B, 2)
    assert jnp.allclose(node_logits, ref_nodes, rtol=1e-2, atol=1e-2)
    assert jnp.allclose(graph_logits, ref_graphs, rtol=1e-2, atol=1e-2)

    # TODO(synk): for ragged real-world graphs, pad each graph to a fixed N and pass a
    # per-graph node count for the mean readout instead of the fixed 1/N row.
    print("KERNEL_OK")
</pallas_src>

<mosaic_0001>
module attributes {stable_mosaic.version = 11 : i64} {
  func.func @kernel(%arg0: i32, %arg1: memref<1x16x16xf32, #tpu.memory_space<vmem>>, %arg2: memref<1x16x16xf32, #tpu.memory_space<vmem>>, %arg3: memref<304x128xf32, #tpu.memory_space<vmem>>, %arg4: memref<1x17x128xf32, #tpu.memory_space<vmem>>) attributes {dimension_semantics = [#tpu.dimension_semantics<parallel>], iteration_bounds = array<i64: 4>, scalar_prefetch = 0 : i64, scratch_operands = 0 : i64, tpu.core_type = #tpu.core_type<tc>, window_params = [{transform_indices = @transform_0, window_bounds = array<i64: 1, 16, 16>}, {transform_indices = @transform_1, window_bounds = array<i64: 1, 16, 16>}, {pipeline_mode = #tpu.pipeline_mode<synchronous>, transform_indices = @transform_2, window_bounds = array<i64: 304, 128>}, {transform_indices = @transform_3, window_bounds = array<i64: 1, 17, 128>}]} {
    %c0 = arith.constant 0 : index
    %c0_0 = arith.constant 0 : index
    %c0_1 = arith.constant 0 : index
    %0 = vector.load %arg1[%c0, %c0_0, %c0_1] : memref<1x16x16xf32, #tpu.memory_space<vmem>>, vector<1x16x16xf32>
    %1 = vector.shape_cast %0 : vector<1x16x16xf32> to vector<16x16xf32>
    %c0_2 = arith.constant 0 : index
    %c0_3 = arith.constant 0 : index
    %c0_4 = arith.constant 0 : index
    %2 = vector.load %arg2[%c0_2, %c0_3, %c0_4] : memref<1x16x16xf32, #tpu.memory_space<vmem>>, vector<1x16x16xf32>
    %3 = vector.shape_cast %2 : vector<1x16x16xf32> to vector<16x16xf32>
    %c0_5 = arith.constant 0 : index
    %c0_6 = arith.constant 0 : index
    %4 = vector.load %arg3[%c0_5, %c0_6] : memref<304x128xf32, #tpu.memory_space<vmem>>, vector<16x32xf32>
    %c16 = arith.constant 16 : index
    %c0_7 = arith.constant 0 : index
    %5 = vector.load %arg3[%c16, %c0_7] : memref<304x128xf32, #tpu.memory_space<vmem>>, vector<32x8xf32>
    %c48 = arith.constant 48 : index
    %c0_8 = arith.constant 0 : index
    %6 = vector.load %arg3[%c48, %c0_8] : memref<304x128xf32, #tpu.memory_space<vmem>>, vector<1x32xf32>
    %c56 = arith.constant 56 : index
    %c0_9 = arith.constant 0 : index
    %7 = vector.load %arg3[%c56, %c0_9] : memref<304x128xf32, #tpu.memory_space<vmem>>, vector<4x32xf32>
    %c64 = arith.constant 64 : index
    %c0_10 = arith.constant 0 : index
    %8 = vector.load %arg3[%c64, %c0_10] : memref<304x128xf32, #tpu.memory_space<vmem>>, vector<64x4xf32>
    %c128 = arith.constant 128 : index
    %c0_11 = arith.constant 0 : index
    %9 = vector.load %arg3[%c128, %c0_11] : memref<304x128xf32, #tpu.memory_space<vmem>>, vector<64x16xf32>
    %c192 = arith.constant 192 : index
    %c0_12 = arith.constant 0 : index
    %10 = vector.load %arg3[%c192, %c0_12] : memref<304x128xf32, #tpu.memory_space<vmem>>, vector<32x8xf32>
    %c224 = arith.constant 224 : index
    %c0_13 = arith.constant 0 : index
    %11 = vector.load %arg3[%c224, %c0_13] : memref<304x128xf32, #tpu.memory_space<vmem>>, vector<8x2xf32>
    %c232 = arith.constant 232 : index
    %c0_14 = arith.constant 0 : index
    %12 = vector.load %arg3[%c232, %c0_14] : memref<304x128xf32, #tpu.memory_space<vmem>>, vector<1x8xf32>
    %c240 = arith.constant 240 : index
    %c0_15 = arith.constant 0 : index
    %13 = vector.load %arg3[%c240, %c0_15] : memref<304x128xf32, #tpu.memory_space<vmem>>, vector<17x16xf32>
    %c264 = arith.constant 264 : index
    %c0_16 = arith.constant 0 : index
    %14 = vector.load %arg3[%c264, %c0_16] : memref<304x128xf32, #tpu.memory_space<vmem>>, vector<8x16xf32>
    %c272 = arith.constant 272 : index
    %c0_17 = arith.constant 0 : index
    %15 = vector.load %arg3[%c272, %c0_17] : memref<304x128xf32, #tpu.memory_space<vmem>>, vector<1x16xf32>
    %c280 = arith.constant 280 : index
    %c0_18 = arith.constant 0 : index
    %16 = vector.load %arg3[%c280, %c0_18] : memref<304x128xf32, #tpu.memory_space<vmem>>, vector<16x128xf32>
    %c296 = arith.constant 296 : index
    %c0_19 = arith.constant 0 : index
    %17 = vector.load %arg3[%c296, %c0_19] : memref<304x128xf32, #tpu.memory_space<vmem>>, vector<1x128xf32>
    %cst = arith.constant dense<0.000000e+00> : vector<16x32xf32>
    %18 = tpu.matmul %1, %4, %cst {dimension_numbers = #tpu.dot_dimension_numbers<[1], [0], [0], [1], [0, 0, 1, 1], [], []>} : vector<16x16xf32>, vector<16x32xf32>, vector<16x32xf32> -> vector<16x32xf32>
    %cst_20 = arith.constant dense<0.000000e+00> : vector<16x8xf32>
    %19 = tpu.matmul %18, %5, %cst_20 {dimension_numbers = #tpu.dot_dimension_numbers<[1], [0], [0], [1], [0, 0, 1, 1], [], []>} : vector<16x32xf32>, vector<32x8xf32>, vector<16x8xf32> -> vector<16x8xf32>
    %20 = tpu.transpose %19, [1, 0] : vector<16x8xf32> -> vector<8x16xf32>
    %21 = vector.extract_strided_slice %20 {offsets = [0, 0], sizes = [4, 16], strides = [1, 1]} : vector<8x16xf32> to vector<4x16xf32>
    %22 = vector.extract_strided_slice %20 {offsets = [4, 0], sizes = [4, 16], strides = [1, 1]} : vector<8x16xf32> to vector<4x16xf32>
    %cst_21 = arith.constant dense<0.000000e+00> : vector<64x16xf32>
    %23 = tpu.matmul %8, %21, %cst_21 {dimension_numbers = #tpu.dot_dimension_numbers<[1], [0], [0], [1], [0, 0, 1, 1], [], []>} : vector<64x4xf32>, vector<4x16xf32>, vector<64x16xf32> -> vector<64x16xf32>
    %cst_22 = arith.constant dense<0.000000e+00> : vector<64x16xf32>
    %24 = tpu.matmul %8, %22, %cst_22 {dimension_numbers = #tpu.dot_dimension_numbers<[1], [0], [0], [1], [0, 0, 1, 1], [], []>} : vector<64x4xf32>, vector<4x16xf32>, vector<64x16xf32> -> vector<64x16xf32>
    %25 = arith.mulf %24, %9 : vector<64x16xf32>
    %cst_23 = arith.constant dense<0.000000e+00> : vector<64xf32>
    %26 = vector.multi_reduction <add>, %25, %cst_23 [1] : vector<64x16xf32> to vector<64xf32>
    %27 = vector.shape_cast %26 : vector<64xf32> to vector<64x1xf32>
    %cst_24 = arith.constant dense<0.000000e+00> : vector<64x16xf32>
    %28 = tpu.matmul %9, %3, %cst_24 {dimension_numbers = #tpu.dot_dimension_numbers<[1], [0], [0], [1], [0, 0, 1, 1], [], []>} : vector<64x16xf32>, vector<16x16xf32>, vector<64x16xf32> -> vector<64x16xf32>
    %29 = vector.broadcast %27 : vector<64x1xf32> to vector<64x16xf32>
    %30 = arith.addf %29, %23 : vector<64x16xf32>
    %cst_25 = arith.constant 0.000000e+00 : f32
    %31 = vector.broadcast %cst_25 : f32 to vector<64x16xf32>
    %32 = arith.cmpf ogt, %30, %31 : vector<64x16xf32>
    %cst_26 = arith.constant 2.000000e-01 : f32
    %33 = vector.broadcast %cst_26 : f32 to vector<64x16xf32>
    %34 = arith.mulf %33, %30 : vector<64x16xf32>
    %35 = arith.select %32, %30, %34 : vector<64x16xi1>, vector<64x16xf32>
    %36 = arith.addf %35, %28 : vector<64x16xf32>
    %cst_27 = arith.constant dense<0xFF800000> : vector<64xf32>
    %37 = vector.multi_reduction <maximumf>, %36, %cst_27 [1] : vector<64x16xf32> to vector<64xf32>
    %38 = vector.shape_cast %37 : vector<64xf32> to vector<64x1xf32>
    %39 = vector.broadcast %38 : vector<64x1xf32> to vector<64x16xf32>
    %40 = arith.subf %36, %39 : vector<64x16xf32>
    %41 = math.exp %40 : vector<64x16xf32>
    %cst_28 = arith.constant dense<0.000000e+00> : vector<64xf32>
    %42 = vector.multi_reduction <add>, %41, %cst_28 [1] : vector<64x16xf32> to vector<64xf32>
    %43 = vector.shape_cast %42 : vector<64xf32> to vector<64x1xf32>
    %44 = tpu.reciprocal %43 {approx = true} : vector<64x1xf32> -> vector<64x1xf32>
    %45 = vector.broadcast %44 : vector<64x1xf32> to vector<64x16xf32>
    %46 = arith.mulf %41, %45 : vector<64x16xf32>
    %cst_29 = arith.constant dense<0.000000e+00> : vector<64x32xf32>
    %47 = tpu.matmul %46, %18, %cst_29 {dimension_numbers = #tpu.dot_dimension_numbers<[1], [0], [0], [1], [0, 0, 1, 1], [], []>} : vector<64x16xf32>, vector<16x32xf32>, vector<64x32xf32> -> vector<64x32xf32>
    %48 = vector.extract_strided_slice %47 {offsets = [0, 0], sizes = [16, 32], strides = [1, 1]} : vector<64x32xf32> to vector<16x32xf32>
    %49 = vector.extract_strided_slice %7 {offsets = [0, 0], sizes = [1, 32], strides = [1, 1]} : vector<4x32xf32> to vector<1x32xf32>
    %50 = vector.broadcast %49 : vector<1x32xf32> to vector<16x32xf32>
    %51 = arith.mulf %48, %50 : vector<16x32xf32>
    %52 = vector.extract_strided_slice %47 {offsets = [16, 0], sizes = [16, 32], strides = [1, 1]} : vector<64x32xf32> to vector<16x32xf32>
    %53 = vector.extract_strided_slice %7 {offsets = [1, 0], sizes = [1, 32], strides = [1, 1]} : vector<4x32xf32> to vector<1x32xf32>
    %54 = vector.broadcast %53 : vector<1x32xf32> to vector<16x32xf32>
    %55 = arith.mulf %52, %54 : vector<16x32xf32>
    %56 = arith.addf %51, %55 : vector<16x32xf32>
    %57 = vector.extract_strided_slice %47 {offsets = [32, 0], sizes = [16, 32], strides = [1, 1]} : vector<64x32xf32> to vector<16x32xf32>
    %58 = vector.extract_strided_slice %7 {offsets = [2, 0], sizes = [1, 32], strides = [1, 1]} : vector<4x32xf32> to vector<1x32xf32>
    %59 = vector.broadcast %58 : vector<1x32xf32> to vector<16x32xf32>
    %60 = arith.mulf %57, %59 : vector<16x32xf32>
    %61 = arith.addf %56, %60 : vector<16x32xf32>
    %62 = vector.extract_strided_slice %47 {offsets = [48, 0], sizes = [16, 32], strides = [1, 1]} : vector<64x32xf32> to vector<16x32xf32>
    %63 = vector.extract_strided_slice %7 {offsets = [3, 0], sizes = [1, 32], strides = [1, 1]} : vector<4x32xf32> to vector<1x32xf32>
    %64 = vector.broadcast %63 : vector<1x32xf32> to vector<16x32xf32>
    %65 = arith.mulf %62, %64 : vector<16x32xf32>
    %66 = arith.addf %61, %65 : vector<16x32xf32>
    %67 = vector.broadcast %6 : vector<1x32xf32> to vector<16x32xf32>
    %68 = arith.addf %66, %67 : vector<16x32xf32>
    %cst_30 = arith.constant dense<0.000000e+00> : vector<16x8xf32>
    %69 = tpu.matmul %68, %10, %cst_30 {dimension_numbers = #tpu.dot_dimension_numbers<[1], [0], [0], [1], [0, 0, 1, 1], [], []>} : vector<16x32xf32>, vector<32x8xf32>, vector<16x8xf32> -> vector<16x8xf32>
    %cst_31 = arith.constant dense<0.000000e+00> : vector<16x2xf32>
    %70 = tpu.matmul %69, %11, %cst_31 {dimension_numbers = #tpu.dot_dimension_numbers<[1], [0], [0], [1], [0, 0, 1, 1], [], []>} : vector<16x8xf32>, vector<8x2xf32>, vector<16x2xf32> -> vector<16x2xf32>
    %71 = tpu.transpose %70, [1, 0] : vector<16x2xf32> -> vector<2x16xf32>
    %72 = vector.extract_strided_slice %71 {offsets = [0, 0], sizes = [1, 16], strides = [1, 1]} : vector<2x16xf32> to vector<1x16xf32>
    %73 = vector.extract_strided_slice %70 {offsets = [0, 1], sizes = [16, 1], strides = [1, 1]} : vector<16x2xf32> to vector<16x1xf32>
    %74 = vector.broadcast %73 : vector<16x1xf32> to vector<16x16xf32>
    %75 = vector.broadcast %72 : vector<1x16xf32> to vector<16x16xf32>
    %76 = arith.addf %74, %75 : vector<16x16xf32>
    %cst_32 = arith.constant 0.000000e+00 : f32
    %77 = vector.broadcast %cst_32 : f32 to vector<16x16xf32>
    %78 = arith.cmpf ogt, %76, %77 : vector<16x16xf32>
    %cst_33 = arith.constant 2.000000e-01 : f32
    %79 = vector.broadcast %cst_33 : f32 to vector<16x16xf32>
    %80 = arith.mulf %79, %76 : vector<16x16xf32>
    %81 = arith.select %78, %76, %80 : vector<16x16xi1>, vector<16x16xf32>
    %82 = arith.addf %81, %3 : vector<16x16xf32>
    %cst_34 = arith.constant dense<0xFF800000> : vector<16xf32>
    %83 = vector.multi_reduction <maximumf>, %82, %cst_34 [1] : vector<16x16xf32> to vector<16xf32>
    %84 = vector.shape_cast %83 : vector<16xf32> to vector<16x1xf32>
    %85 = vector.broadcast %84 : vector<16x1xf32> to vector<16x16xf32>
    %86 = arith.subf %82, %85 : vector<16x16xf32>
    %87 = math.exp %86 : vector<16x16xf32>
    %cst_35 = arith.constant dense<0.000000e+00> : vector<16xf32>
    %88 = vector.multi_reduction <add>, %87, %cst_35 [1] : vector<16x16xf32> to vector<16xf32>
    %89 = vector.shape_cast %88 : vector<16xf32> to vector<16x1xf32>
    %90 = tpu.reciprocal %89 {approx = true} : vector<16x1xf32> -> vector<16x1xf32>
    %91 = vector.broadcast %90 : vector<16x1xf32> to vector<16x16xf32>
    %92 = arith.mulf %87, %91 : vector<16x16xf32>
    %cst_36 = arith.constant dense<0.000000e+00> : vector<16x8xf32>
    %93 = tpu.matmul %92, %69, %cst_36 {dimension_numbers = #tpu.dot_dimension_numbers<[1], [0], [0], [1], [0, 0, 1, 1], [], []>} : vector<16x16xf32>, vector<16x8xf32>, vector<16x8xf32> -> vector<16x8xf32>
    %94 = vector.broadcast %12 : vector<1x8xf32> to vector<16x8xf32>
    %95 = arith.addf %93, %94 : vector<16x8xf32>
    %cst_37 = arith.constant dense<0.000000e+00> : vector<17x8xf32>
    %96 = tpu.matmul %13, %95, %cst_37 {dimension_numbers = #tpu.dot_dimension_numbers<[1], [0], [0], [1], [0, 0, 1, 1], [], []>} : vector<17x16xf32>, vector<16x8xf32>, vector<17x8xf32> -> vector<17x8xf32>
    %cst_38 = arith.constant dense<0.000000e+00> : vector<17x16xf32>
    %97 = tpu.matmul %96, %14, %cst_38 {dimension_numbers = #tpu.dot_dimension_numbers<[1], [0], [0], [1], [0, 0, 1, 1], [], []>} : vector<17x8xf32>, vector<8x16xf32>, vector<17x16xf32> -> vector<17x16xf32>
    %98 = vector.broadcast %15 : vector<1x16xf32> to vector<17x16xf32>
    %99 = arith.addf %97, %98 : vector<17x16xf32>
    %cst_39 = arith.constant 0.000000e+00 : f32
    %100 = vector.broadcast %cst_39 : f32 to vector<17x16xf32>
    %101 = arith.maximumf %99, %100 : vector<17x16xf32>
    %cst_40 = arith.constant dense<0.000000e+00> : vector<17x128xf32>
    %102 = tpu.matmul %101, %16, %cst_40 {dimension_numbers = #tpu.dot_dimension_numbers<[1], [0], [0], [1], [0, 0, 1, 1], [], []>} : vector<17x16xf32>, vector<16x128xf32>, vector<17x128xf32> -> vector<17x128xf32>
    %103 = vector.broadcast %17 : vector<1x128xf32> to vector<17x128xf32>
    %104 = arith.addf %102, %103 : vector<17x128xf32>
    %c0_41 = arith.constant 0 : index
    %c0_42 = arith.constant 0 : index
    %c0_43 = arith.constant 0 : index
    %105 = vector.load %arg4[%c0_41, %c0_42, %c0_43] : memref<1x17x128xf32, #tpu.memory_space<vmem>>, vector<1x17x128xf32>
    %106 = vector.shape_cast %105 : vector<1x17x128xf32> to vector<17x128xf32>
    %107 = vector.shape_cast %104 : vector<17x128xf32> to vector<1x17x128xf32>
    tpu.vector_store %arg4[%c0_41, %c0_42, %c0_43], %107 {strides = array<i32>} : memref<1x17x128xf32, #tpu.memory_space<vmem>>, vector<1x17x128xf32>,
    return
  }
  func.func @transform_0(%arg0: i32) -> (i32, i32, i32) {
    %c0_i32 = arith.constant 0 : i32
    %c0_i32_0 = arith.constant 0 : i32
    %c0_i32_1 = arith.constant 0 : i32
    return %arg0, %c0_i32, %c0_i32_0 : i32, i32, i32
  }
  func.func @transform_1(%arg0: i32) -> (i32, i32, i32) {
    %c0_i32 = arith.constant 0 : i32
    %c0_i32_0 = arith.constant 0 : i32
    %c0_i32_1 = arith.constant 0 : i32
    return %arg0, %c0_i32, %c0_i32_0 : i32, i32, i32
  }
  func.func @transform_2(%arg0: i32) -> (i32, i32) {
    %c0_i32 = arith.constant 0 : i32
    %c0_i32_0 = arith.constant 0 : i32
    %c0_i32_1 = arith.constant 0 : i32
    return %c0_i32, %c0_i32_0 : i32, i32
  }
  func.func @transform_3(%arg0: i32) -> (i32, i32, i32) {
    %c0_i32 = arith.constant 0 : i32
    %c0_i32_0 = arith.constant 0 : i32
    %c0_i32_1 = arith.constant 0 : i32
    return %arg0, %c0_i32, %c0_i32_0 : i32, i32, i32
  }
}

</mosaic_0001>

<llo_original>
// kernel: multitask_gat_forward.1
$region0: #{multitask_gat_forward.1}
  #allocation0 [shape = 'u32[]', space=smem, size = 0x4, offset = 0x4, fixed_abs, tag = 'smem constant byte address 0x4 - core index']
  #allocation1 [shape = 'u32[144,128]{1,0:T(1,128)}', space=vmem, size = 0x12000, scoped, tag = 'internal scratch']
  %s0 = inlined_call_operand.hbm [shape: f32[4,16,16], index: 0, kind: input, shape index: {}]
  %s1 = inlined_call_operand.hbm [shape: f32[4,16,16], index: 1, kind: input, shape index: {}]
  %s2 = inlined_call_operand.hbm [shape: f32[304,128], index: 2, kind: input, shape index: {}]
  %s3 = inlined_call_operand.vmem [shape: f32[4,17,128], index: 3, kind: output, shape index: {}]
  %s4 = sld [smem:[#allocation0]]
  $region57: #{multitask_gat_forward.1} parent=0
    _
  %s6 = ssub.s32 1, %s4
  %s7 = scalar_select 0, %s6, %s4
  $region1: #{multitask_gat_forward.1} parent=0
    #allocation2 [shape = 'u8[16384]{0}', space=vmem, size = 0x4000, scoped, tag = 'input window, operand 0']
    #allocation3 [shape = 's32[2]{0}', space=sflag, size = 0x8, scoped, tag = 'scoped memory for multitask_gat_forward.1']
    #allocation4 [shape = 'u8[16384]{0}', space=vmem, size = 0x4000, scoped, tag = 'input window, operand 1']
    #allocation5 [shape = 's32[2]{0}', space=sflag, size = 0x8, scoped, tag = 'scoped memory for multitask_gat_forward.1']
    #allocation6 [shape = 'u8[155648]{0}', space=vmem, size = 0x26000, scoped, tag = 'input window, operand 2, single buffered']
    %8 = vsyncpa [#allocation3], 0
    %s9 = scalar_lea.sflag [#allocation3], 1
    %10 = vsyncpa %s9, 0
    %11 = vsyncpa [#allocation5], 0
    %s12 = scalar_lea.sflag [#allocation5], 1
    %13 = vsyncpa %s12, 0
    loop: start=0, step=1, limit=6
    $region2: #{multitask_gat_forward.1} parent=1 // loop_pre_header
      _
    $region3: #{multitask_gat_forward.1} parent=1 // loop_header
      %s15 = sphi 0, %s19
      %p16 = scmp.ge.s32.totalorder %s15, 6
      %s25 = sphi 0, %s27
      %s28 = sphi 0, %s25
      %s29 = sphi 0, %s28
      %s45 = sphi 0, %s29
      %s51 = sphi 0, %s53
      %s54 = sphi 0, %s51
      %s55 = sphi 0, %s54
      %s71 = sphi 0, %s55
      %s75 = sphi 0, %s75
      %s77 = sphi 0, %s75
      %s78 = sphi 0, %s77
      %s92 = sphi 0, %s78
      %s98 = sphi 0, %s100
      %s101 = sphi 0, %s98
      %s102 = sphi 0, %s101
      %s118 = sphi 0, %s102
    $region4: #{multitask_gat_forward.1} parent=1 // loop_header_branch
      %18 = sbr.rel (%p16) target = $region8
    $region5: #{multitask_gat_forward.1} parent=1 // loop_body
      %s20 = ssub.s32 %s15, 1
      %s21 = ssub.s32 %s15, 2
      %s22 = sadd.s32 %s15, 1
      %s23 = ssub.s32 %s15, %s22
      %p24 = scmp.eq.s32.totalorder %s23, 0
      %s26 = sadd.s32 %s25, 1
      %s27 = scalar_select %p24, %s25, %s26
      %p30 = pneg %p24
      %p31 = scmp.eq.s32.totalorder %s15, 3
      %p32 = por %p30, %p31
      %p33 = scmp.ne.s32.totalorder %s25, %s28
      %p34 = scmp.eq.s32.totalorder %s15, 0
      %p35 = por %p33, %p34
      %p36 = scmp.ne.s32.totalorder %s25, %s28
      %p37 = scmp.eq.s32.totalorder %s20, 3
      %p38 = por %p36, %p37
      %p39 = scmp.ne.s32.totalorder %s28, %s29
      %p40 = scmp.eq.s32.totalorder %s20, 0
      %p41 = por %p39, %p40
      %p42 = scmp.ne.s32.totalorder %s28, %s29
      %p43 = scmp.eq.s32.totalorder %s21, 3
      %p44 = por %p42, %p43
      %p46 = scmp.ne.s32.totalorder %s29, %s45
      %p47 = scmp.eq.s32.totalorder %s21, 0
      %p48 = por %p46, %p47
      %s49 = ssub.s32 %s15, %s22
      %p50 = scmp.eq.s32.totalorder %s49, 0
      %s52 = sadd.s32 %s51, 1
      %s53 = scalar_select %p50, %s51, %s52
      %p56 = pneg %p50
      %p57 = scmp.eq.s32.totalorder %s15, 3
      %p58 = por %p56, %p57
      %p59 = scmp.ne.s32.totalorder %s51, %s54
      %p60 = scmp.eq.s32.totalorder %s15, 0
      %p61 = por %p59, %p60
      %p62 = scmp.ne.s32.totalorder %s51, %s54
      %p63 = scmp.eq.s32.totalorder %s20, 3
      %p64 = por %p62, %p63
      %p65 = scmp.ne.s32.totalorder %s54, %s55
      %p66 = scmp.eq.s32.totalorder %s20, 0
      %p67 = por %p65, %p66
      %p68 = scmp.ne.s32.totalorder %s54, %s55
      %p69 = scmp.eq.s32.totalorder %s21, 3
      %p70 = por %p68, %p69
      %p72 = scmp.ne.s32.totalorder %s55, %s71
      %p73 = scmp.eq.s32.totalorder %s21, 0
      %p74 = por %p72, %p73
      %s76 = sadd.s32 %s75, 1
      %p79 = scmp.eq.s32.totalorder %s15, 3
      %p80 = scmp.ne.s32.totalorder %s75, %s77
      %p81 = scmp.eq.s32.totalorder %s15, 0
      %p82 = por %p80, %p81
      %p83 = scmp.ne.s32.totalorder %s75, %s77
      %p84 = scmp.eq.s32.totalorder %s20, 3
      %p85 = por %p83, %p84
      %p86 = scmp.ne.s32.totalorder %s77, %s78
      %p87 = scmp.eq.s32.totalorder %s20, 0
      %p88 = por %p86, %p87
      %p89 = scmp.ne.s32.totalorder %s77, %s78
      %p90 = scmp.eq.s32.totalorder %s21, 3
      %p91 = por %p89, %p90
      %p93 = scmp.ne.s32.totalorder %s78, %s92
      %p94 = scmp.eq.s32.totalorder %s21, 0
      %p95 = por %p93, %p94
      %s96 = ssub.s32 %s15, %s22
      %p97 = scmp.eq.s32.totalorder %s96, 0
      %s99 = sadd.s32 %s98, 1
      %s100 = scalar_select %p97, %s98, %s99
      %p103 = pneg %p97
      %p104 = scmp.eq.s32.totalorder %s15, 3
      %p105 = por %p103, %p104
      %p106 = scmp.ne.s32.totalorder %s98, %s101
      %p107 = scmp.eq.s32.totalorder %s15, 0
      %p108 = por %p106, %p107
      %p109 = scmp.ne.s32.totalorder %s98, %s101
      %p110 = scmp.eq.s32.totalorder %s20, 3
      %p111 = por %p109, %p110
      %p112 = scmp.ne.s32.totalorder %s101, %s102
      %p113 = scmp.eq.s32.totalorder %s20, 0
      %p114 = por %p112, %p113
      %p115 = scmp.ne.s32.totalorder %s101, %s102
      %p116 = scmp.eq.s32.totalorder %s21, 3
      %p117 = por %p115, %p116
      %p119 = scmp.ne.s32.totalorder %s102, %s118
      %p120 = scmp.eq.s32.totalorder %s21, 0
      %p121 = por %p119, %p120
      %p122 = scmp.le.s32.totalorder 1, %s15
      %p123 = scmp.lt.s32.totalorder %s15, 5
      %p124 = pnand %p122, %p123
      %p125 = pneg %p124
      // Predicated region
      $region9: #{multitask_gat_forward.1} parent=5 // pred_check
        _
      $region10: #{multitask_gat_forward.1} parent=5 // pred_check_branch
        %127 = sbr.rel (%p124) target = $region12
      $region11: #{multitask_gat_forward.1} parent=5 // pred_region
        %s128 = ssub.s32 %s15, 1
        // Predicated region
        $region13: #{multitask_gat_forward.1} parent=11 // pred_check
          %p129 = pneg %p88
        $region14: #{multitask_gat_forward.1} parent=11 // pred_check_branch
          %131 = sbr.rel (%p129) target = $region16
        $region15: #{multitask_gat_forward.1} parent=11 // pred_region
          %s133 = ssub.s32 4864, 4864
          %134 = vsyncadd [#allocation5], %s133
          %s135 = sshll.u32 [#allocation6], 4
          %s136 = int_to_ptr.vmem [resolvable:$true] %s135
          %141 = dma.hbm_to_vmem [thread:$0]  %s2, 4864, %s136, [#allocation5], 128, 128, 8
        $region16: #{multitask_gat_forward.1} parent=11 // pred_fallthru
          _
      $region12: #{multitask_gat_forward.1} parent=5 // pred_fallthru
        _
      %p142 = scmp.lt.s32.totalorder %s15, 4
      // Predicated region
      $region17: #{multitask_gat_forward.1} parent=5 // pred_check
        %p143 = pneg %p142
      $region18: #{multitask_gat_forward.1} parent=5 // pred_check_branch
        %145 = sbr.rel (%p143) target = $region20
      $region19: #{multitask_gat_forward.1} parent=5 // pred_region
        // Predicated region
        $region21: #{multitask_gat_forward.1} parent=19 // pred_check
          %p146 = pneg %p35
        $region22: #{multitask_gat_forward.1} parent=19 // pred_check_branch
          %148 = sbr.rel (%p146) target = $region24
        $region23: #{multitask_gat_forward.1} parent=19 // pred_region
          %s149 = sand.u32 %s25, 1
          %s150 = scalar_lea.sflag [#allocation3], %s149
          %s151 = sand.u32 %s25, 1
          %s152 = smul.addr %s151, 16
          %s153 = scalar_lea.vmem [#allocation2], %s152
          %s155 = ssub.s32 256, 256
          %156 = vsyncadd %s150, %s155
          %s157 = smul.addr %s15, 2
          %s158 = smul.addr %s157, 128
          %s159 = scalar_lea.hbm %s0, %s158
          %s160 = sshll.u32 %s153, 4
          %s161 = int_to_ptr.vmem [resolvable:$true] %s160
          %166 = dma.hbm_to_vmem [thread:$0]  %s159, 256, %s161, %s150, 128, 128, 8
        $region24: #{multitask_gat_forward.1} parent=19 // pred_fallthru
          _
        // Predicated region
        $region25: #{multitask_gat_forward.1} parent=19 // pred_check
          %p167 = pneg %p61
        $region26: #{multitask_gat_forward.1} parent=19 // pred_check_branch
          %169 = sbr.rel (%p167) target = $region28
        $region27: #{multitask_gat_forward.1} parent=19 // pred_region
          %s170 = sand.u32 %s15, 1
          %s171 = scalar_lea.sflag [#allocation5], %s170
          %s172 = sand.u32 %s51, 1
          %s173 = smul.addr %s172, 16
          %s174 = scalar_lea.vmem [#allocation4], %s173
          %s176 = ssub.s32 256, 256
          %177 = vsyncadd %s171, %s176
          %s178 = smul.addr %s15, 2
          %s179 = smul.addr %s178, 128
          %s180 = scalar_lea.hbm %s1, %s179
          %s181 = sshll.u32 %s174, 4
          %s182 = int_to_ptr.vmem [resolvable:$true] %s181
          %187 = dma.hbm_to_vmem [thread:$0]  %s180, 256, %s182, %s171, 128, 128, 8
        $region28: #{multitask_gat_forward.1} parent=19 // pred_fallthru
          _
      $region20: #{multitask_gat_forward.1} parent=5 // pred_fallthru
        _
      %p188 = scmp.le.s32.totalorder 1, %s15
      %p189 = scmp.lt.s32.totalorder %s15, 5
      %p190 = pnand %p188, %p189
      %p191 = pneg %p190
      // Predicated region
      $region29: #{multitask_gat_forward.1} parent=5 // pred_check
        _
      $region30: #{multitask_gat_forward.1} parent=5 // pred_check_branch
        %193 = sbr.rel (%p190) target = $region32
      $region31: #{multitask_gat_forward.1} parent=5 // pred_region
        %s194 = ssub.s32 %s15, 1
        %s195 = sand.u32 %s28, 1
        %s196 = scalar_lea.sflag [#allocation3], %s195
        %s197 = sand.u32 %s28, 1
        %s198 = smul.addr %s197, 16
        %s199 = scalar_lea.vmem [#allocation2], %s198
        // Predicated region
        $region33: #{multitask_gat_forward.1} parent=31 // pred_check
          %p200 = pneg %p41
        $region34: #{multitask_gat_forward.1} parent=31 // pred_check_branch
          %202 = sbr.rel (%p200) target = $region36
        $region35: #{multitask_gat_forward.1} parent=31 // pred_region
          %203 = dma.done %s196, 256
        $region36: #{multitask_gat_forward.1} parent=31 // pred_fallthru
          _
        %s204 = sand.u32 %s20, 1
        %s205 = scalar_lea.sflag [#allocation5], %s204
        %s206 = sand.u32 %s54, 1
        %s207 = smul.addr %s206, 16
        %s208 = scalar_lea.vmem [#allocation4], %s207
        // Predicated region
        $region37: #{multitask_gat_forward.1} parent=31 // pred_check
          %p209 = pneg %p67
        $region38: #{multitask_gat_forward.1} parent=31 // pred_check_branch
          %211 = sbr.rel (%p209) target = $region40
        $region39: #{multitask_gat_forward.1} parent=31 // pred_region
          %212 = dma.done %s205, 256
        $region40: #{multitask_gat_forward.1} parent=31 // pred_fallthru
          _
        // Predicated region
        $region41: #{multitask_gat_forward.1} parent=31 // pred_check
          %p213 = pneg %p88
        $region42: #{multitask_gat_forward.1} parent=31 // pred_check_branch
          %215 = sbr.rel (%p213) target = $region44
        $region43: #{multitask_gat_forward.1} parent=31 // pred_region
          %216 = dma.done [#allocation5], 4864
        $region44: #{multitask_gat_forward.1} parent=31 // pred_fallthru
          _
        %s217 = sand.u32 %s28, 1
        %s218 = scalar_lea.sflag [#allocation3], %s217
        %s219 = sand.u32 %s28, 1
        %s220 = smul.addr %s219, 16
        %s221 = scalar_lea.vmem [#allocation2], %s220
        %p222 = pneg %p41
        %p223 = pneg %p38
        %s224 = sand.u32 %s20, 1
        %s225 = scalar_lea.sflag [#allocation5], %s224
        %s226 = sand.u32 %s54, 1
        %s227 = smul.addr %s226, 16
        %s228 = scalar_lea.vmem [#allocation4], %s227
        %p229 = pneg %p67
        %p230 = pneg %p64
        %p231 = pneg %p88
        %p232 = pneg %p85
        %p233 = pneg %p114
        %p234 = pneg %p111
        %p235 = scmp.lt.s32.totalorder %s20, 3
        %s236 = scalar_select %p235, %s20, 3
        %s237 = smul.addr %s236, 3
        %s238 = smul.addr %s237, 8
        %s239 = scalar_lea.vmem %s3, %s238
        %p240 = scmp.lt.s32.totalorder %s20, 3
        %s241 = scalar_select %p240, %s20, 3
        %s242 = smul.addr %s241, 3
        %s243 = smul.addr %s242, 8
        %s244 = scalar_lea.vmem %s3, %s243
        %v245 = vld [vmem:[%s199] sm:$0xff]
        %v246 = vld [vmem:[%s199 + $0x8] sm:$0xff]
        %v247 = vld [vmem:[%s208] sm:$0xff]
        %v248 = vld [vmem:[%s208 + $0x8] sm:$0xff]
        %v249 = vld [vmem:[#allocation6] sm:$0xff]
        %v250 = vld [vmem:[#allocation6 + $0x8] sm:$0xff]
        %v251 = vld [vmem:[#allocation6 + $0x10] sm:$0xff]
        %v252 = vld [vmem:[#allocation6 + $0x18] sm:$0xff]
        %v253 = vld [vmem:[#allocation6 + $0x20] sm:$0xff]
        %v254 = vld [vmem:[#allocation6 + $0x28] sm:$0xff]
        %v255 = vld [vmem:[#allocation6 + $0x30] sm:$0x1]
        %v256 = vld [vmem:[#allocation6 + $0x38] sm:$0xf]
        %v257 = vld [vmem:[#allocation6 + $0x40] sm:$0xff]
        %v258 = vld [vmem:[#allocation6 + $0x48] sm:$0xff]
        %v259 = vld [vmem:[#allocation6 + $0x50] sm:$0xff]
        %v260 = vld [vmem:[#allocation6 + $0x58] sm:$0xff]
        %v261 = vld [vmem:[#allocation6 + $0x60] sm:$0xff]
        %v262 = vld [vmem:[#allocation6 + $0x68] sm:$0xff]
        %v263 = vld [vmem:[#allocation6 + $0x70] sm:$0xff]
        %v264 = vld [vmem:[#allocation6 + $0x78] sm:$0xff]
        %v265 = vld [vmem:[#allocation6 + $0x80] sm:$0xff]
        %v266 = vld [vmem:[#allocation6 + $0x88] sm:$0xff]
        %v267 = vld [vmem:[#allocation6 + $0x90] sm:$0xff]
        %v268 = vld [vmem:[#allocation6 + $0x98] sm:$0xff]
        %v269 = vld [vmem:[#allocation6 + $0xa0] sm:$0xff]
        %v270 = vld [vmem:[#allocation6 + $0xa8] sm:$0xff]
        %v271 = vld [vmem:[#allocation6 + $0xb0] sm:$0xff]
        %v272 = vld [vmem:[#allocation6 + $0xb8] sm:$0xff]
        %v273 = vld [vmem:[#allocation6 + $0xc0] sm:$0xff]
        %v274 = vld [vmem:[#allocation6 + $0xc8] sm:$0xff]
        %v275 = vld [vmem:[#allocation6 + $0xd0] sm:$0xff]
        %v276 = vld [vmem:[#allocation6 + $0xd8] sm:$0xff]
        %v277 = vld [vmem:[#allocation6 + $0xe0] sm:$0xff]
        %v278 = vld [vmem:[#allocation6 + $0xe8] sm:$0x1]
        %v279 = vld [vmem:[#allocation6 + $0xf0] sm:$0xff]
        %v280 = vld [vmem:[#allocation6 + $0xf8] sm:$0xff]
        %v281 = vld [vmem:[#allocation6 + $0x100] sm:$0x1]
        %v282 = vld [vmem:[#allocation6 + $0x108] sm:$0xff]
        %v283 = vld [vmem:[#allocation6 + $0x110] sm:$0x1]
        %v284 = vld [vmem:[#allocation6 + $0x118] sm:$0xff]
        %v285 = vld [vmem:[#allocation6 + $0x120] sm:$0xff]
        %v286 = vld [vmem:[#allocation6 + $0x128] sm:$0x1]
        %vm287 = vcmask 130048
        %v289 = vsel %vm287, %v245, 0
        %v292 = vsel %vm287, %v246, 0
        %294 = vmatprep.subr.mxu0 0.0
        %295 = vmatpush1.msra.mxu0 %v249
        %296 = vmatprep.subr.mxu0 0.0
        %297 = vmatpush1.msra.mxu0 %v250
        %298 = vmatprep.subr.mxu0 0.0
        %299 = vmatpush1.msra.mxu0 0.0
        %300 = vmatprep.subr.mxu0 0.0
        %301 = vmatpush1.msra.mxu0 0.0
        %302 = vmatprep.subr.mxu0 0.0
        %303 = vmatpush1.msra.mxu0 0.0
        %304 = vmatprep.subr.mxu0 0.0
        %305 = vmatpush1.msra.mxu0 0.0
        %306 = vmatprep.subr.mxu0 0.0
        %307 = vmatpush1.msra.mxu0 0.0
        %308 = vmatprep.subr.mxu0 0.0
        %309 = vmatpush1.msra.mxu0 0.0
        %310 = vmatprep.subr.mxu0 0.0
        %311 = vmatpush1.msra.mxu0 0.0
        %312 = vmatprep.subr.mxu0 0.0
        %313 = vmatpush1.msra.mxu0 0.0
        %314 = vmatprep.subr.mxu0 0.0
        %315 = vmatpush1.msra.mxu0 0.0
        %316 = vmatprep.subr.mxu0 0.0
        %317 = vmatpush1.msra.mxu0 0.0
        %318 = vmatprep.subr.mxu0 0.0
        %319 = vmatpush1.msra.mxu0 0.0
        %320 = vmatprep.subr.mxu0 0.0
        %321 = vmatpush1.msra.mxu0 0.0
        %322 = vmatprep.subr.mxu0 0.0
        %323 = vmatpush1.msra.mxu0 0.0
        %324 = vmatprep.subr.mxu0 0.0
        %325 = vmatpush1.msra.mxu0 0.0
        %326 = vmatprep.subr.mxu0 0.0
        %327 = vmatpush1.msra.mxu0 0.0
        %328 = vmatprep.subr.mxu0 0.0
        %329 = vmatpush1.msra.mxu0 0.0
        %330 = vmatprep.subr.mxu0 0.0
        %331 = vmatpush1.msra.mxu0 0.0
        %332 = vmatprep.subr.mxu0 0.0
        %333 = vmatpush1.msra.mxu0 0.0
        %334 = vmatprep.subr.mxu0 0.0
        %335 = vmatpush1.msra.mxu0 0.0
        %336 = vmatprep.subr.mxu0 0.0
        %337 = vmatpush1.msra.mxu0 0.0
        %338 = vmatprep.subr.mxu0 0.0
        %339 = vmatpush1.msra.mxu0 0.0
        %340 = vmatprep.subr.mxu0 0.0
        %341 = vmatpush1.msra.mxu0 0.0
        %342 = vmatprep.subr.mxu0 0.0
        %343 = vmatpush1.msra.mxu0 0.0
        %344 = vmatprep.subr.mxu0 0.0
        %345 = vmatpush1.msra.mxu0 0.0
        %346 = vmatprep.subr.mxu0 0.0
        %347 = vmatpush1.msra.mxu0 0.0
        %348 = vmatprep.subr.mxu0 0.0
        %349 = vmatpush1.msra.mxu0 0.0
        %350 = vmatprep.subr.mxu0 0.0
        %351 = vmatpush1.msra.mxu0 0.0
        %352 = vmatprep.subr.mxu0 0.0
        %353 = vmatpush1.msra.mxu0 0.0
        %354 = vmatprep.subr.mxu0 0.0
        %355 = vmatpush1.msra.mxu0 0.0
        %356 = vmatprep.subr.mxu0 0.0
        %357 = vmatpush1.msra.mxu0 0.0
        %358 = vmatprep.mubr.f32.mxu0 0.0
        %359 = vmatmul.mubr.f32.gmra.mrb[0].mxu0 %v289
        %v360 = vpop.f32.mrb[0].mxu0
        %v361 = vadd.f32 0.0, %v360
        %v362 = vpop.f32.mrb[0].mxu0
        %363 = vmatprep.mubr.f32.mxu0 0.0
        %364 = vmatmul.mubr.f32.gmra.mrb[0].mxu0 %v292
        %v365 = vpop.f32.mrb[0].mxu0
        %v366 = vadd.f32 0.0, %v365
        %v367 = vpop.f32.mrb[0].mxu0
        %368 = vdwg.mxu0
        %vm369 = vcmask 261120
        %v371 = vsel %vm369, %v361, 0
        %v374 = vsel %vm369, %v366, 0
        %376 = vmatprep.subr.mxu0 0.0
        %377 = vmatpush1.msra.mxu0 %v251
        %378 = vmatprep.subr.mxu0 0.0
        %379 = vmatpush1.msra.mxu0 %v252
        %380 = vmatprep.subr.mxu0 0.0
        %381 = vmatpush1.msra.mxu0 %v253
        %382 = vmatprep.subr.mxu0 0.0
        %383 = vmatpush1.msra.mxu0 %v254
        %384 = vmatprep.subr.mxu0 0.0
        %385 = vmatpush1.msra.mxu0 0.0
        %386 = vmatprep.subr.mxu0 0.0
        %387 = vmatpush1.msra.mxu0 0.0
        %388 = vmatprep.subr.mxu0 0.0
        %389 = vmatpush1.msra.mxu0 0.0
        %390 = vmatprep.subr.mxu0 0.0
        %391 = vmatpush1.msra.mxu0 0.0
        %392 = vmatprep.subr.mxu0 0.0
        %393 = vmatpush1.msra.mxu0 0.0
        %394 = vmatprep.subr.mxu0 0.0
        %395 = vmatpush1.msra.mxu0 0.0
        %396 = vmatprep.subr.mxu0 0.0
        %397 = vmatpush1.msra.mxu0 0.0
        %398 = vmatprep.subr.mxu0 0.0
        %399 = vmatpush1.msra.mxu0 0.0
        %400 = vmatprep.subr.mxu0 0.0
        %401 = vmatpush1.msra.mxu0 0.0
        %402 = vmatprep.subr.mxu0 0.0
        %403 = vmatpush1.msra.mxu0 0.0
        %404 = vmatprep.subr.mxu0 0.0
        %405 = vmatpush1.msra.mxu0 0.0
        %406 = vmatprep.subr.mxu0 0.0
        %407 = vmatpush1.msra.mxu0 0.0
        %408 = vmatprep.subr.mxu0 0.0
        %409 = vmatpush1.msra.mxu0 0.0
        %410 = vmatprep.subr.mxu0 0.0
        %411 = vmatpush1.msra.mxu0 0.0
        %412 = vmatprep.subr.mxu0 0.0
        %413 = vmatpush1.msra.mxu0 0.0
        %414 = vmatprep.subr.mxu0 0.0
        %415 = vmatpush1.msra.mxu0 0.0
        %416 = vmatprep.subr.mxu0 0.0
        %417 = vmatpush1.msra.mxu0 0.0
        %418 = vmatprep.subr.mxu0 0.0
        %419 = vmatpush1.msra.mxu0 0.0
        %420 = vmatprep.subr.mxu0 0.0
        %421 = vmatpush1.msra.mxu0 0.0
        %422 = vmatprep.subr.mxu0 0.0
        %423 = vmatpush1.msra.mxu0 0.0
        %424 = vmatprep.subr.mxu0 0.0
        %425 = vmatpush1.msra.mxu0 0.0
        %426 = vmatprep.subr.mxu0 0.0
        %427 = vmatpush1.msra.mxu0 0.0
        %428 = vmatprep.subr.mxu0 0.0
        %429 = vmatpush1.msra.mxu0 0.0
        %430 = vmatprep.subr.mxu0 0.0
        %431 = vmatpush1.msra.mxu0 0.0
        %432 = vmatprep.subr.mxu0 0.0
        %433 = vmatpush1.msra.mxu0 0.0
        %434 = vmatprep.subr.mxu0 0.0
        %435 = vmatpush1.msra.mxu0 0.0
        %436 = vmatprep.subr.mxu0 0.0
        %437 = vmatpush1.msra.mxu0 0.0
        %438 = vmatprep.subr.mxu0 0.0
        %439 = vmatpush1.msra.mxu0 0.0
        %440 = vmatprep.mubr.f32.mxu0 0.0
        %441 = vmatmul.mubr.f32.gmra.mrb[0].mxu0 %v371
        %v442 = vpop.f32.mrb[0].mxu0
        %v443 = vadd.f32 0.0, %v442
        %v444 = vpop.f32.mrb[0].mxu0
        %445 = vmatprep.mubr.f32.mxu0 0.0
        %446 = vmatmul.mubr.f32.gmra.mrb[0].mxu0 %v374
        %v447 = vpop.f32.mrb[0].mxu0
        %v448 = vadd.f32 0.0, %v447
        %v449 = vpop.f32.mrb[0].mxu0
        %450 = vdwg.mxu0
        %vm451 = vcmask 31744
        %v453 = vsel %vm451, %v257, 0
        %v456 = vsel %vm451, %v258, 0
        %v459 = vsel %vm451, %v259, 0
        %v462 = vsel %vm451, %v260, 0
        %v465 = vsel %vm451, %v261, 0
        %v468 = vsel %vm451, %v262, 0
        %v471 = vsel %vm451, %v263, 0
        %v474 = vsel %vm451, %v264, 0
        %v477 = vsel %vm451, %v443, 0
        %v480 = vsel %vm451, %v448, 0
        %482 = vmatprep.subr.mxu0 0.0
        %483 = vmatpush1.xpose.msra.mxu0 %v477
        %484 = vmatprep.subr.mxu0 0.0
        %485 = vmatpush1.xpose.msra.mxu0 %v480
        %486 = vmatprep.subr.mxu0 0.0
        %487 = vmatpush1.xpose.msra.mxu0 0.0
        %488 = vmatprep.subr.mxu0 0.0
        %489 = vmatpush1.xpose.msra.mxu0 0.0
        %490 = vmatprep.subr.mxu0 0.0
        %491 = vmatpush1.xpose.msra.mxu0 0.0
        %492 = vmatprep.subr.mxu0 0.0
        %493 = vmatpush1.xpose.msra.mxu0 0.0
        %494 = vmatprep.subr.mxu0 0.0
        %495 = vmatpush1.xpose.msra.mxu0 0.0
        %496 = vmatprep.subr.mxu0 0.0
        %497 = vmatpush1.xpose.msra.mxu0 0.0
        %498 = vmatprep.subr.mxu0 0.0
        %499 = vmatpush1.xpose.msra.mxu0 0.0
        %500 = vmatprep.subr.mxu0 0.0
        %501 = vmatpush1.xpose.msra.mxu0 0.0
        %502 = vmatprep.subr.mxu0 0.0
        %503 = vmatpush1.xpose.msra.mxu0 0.0
        %504 = vmatprep.subr.mxu0 0.0
        %505 = vmatpush1.xpose.msra.mxu0 0.0
        %506 = vmatprep.subr.mxu0 0.0
        %507 = vmatpush1.xpose.msra.mxu0 0.0
        %508 = vmatprep.subr.mxu0 0.0
        %509 = vmatpush1.xpose.msra.mxu0 0.0
        %510 = vmatprep.subr.mxu0 0.0
        %511 = vmatpush1.xpose.msra.mxu0 0.0
        %512 = vmatprep.subr.mxu0 0.0
        %513 = vmatpush1.xpose.msra.mxu0 0.0
        %514 = vmatprep.subr.mxu0 0.0
        %515 = vmatpush1.xpose.msra.mxu0 0.0
        %516 = vmatprep.subr.mxu0 0.0
        %517 = vmatpush1.xpose.msra.mxu0 0.0
        %518 = vmatprep.subr.mxu0 0.0
        %519 = vmatpush1.xpose.msra.mxu0 0.0
        %520 = vmatprep.subr.mxu0 0.0
        %521 = vmatpush1.xpose.msra.mxu0 0.0
        %522 = vmatprep.subr.mxu0 0.0
        %523 = vmatpush1.xpose.msra.mxu0 0.0
        %524 = vmatprep.subr.mxu0 0.0
        %525 = vmatpush1.xpose.msra.mxu0 0.0
        %526 = vmatprep.subr.mxu0 0.0
        %527 = vmatpush1.xpose.msra.mxu0 0.0
        %528 = vmatprep.subr.mxu0 0.0
        %529 = vmatpush1.xpose.msra.mxu0 0.0
        %530 = vmatprep.subr.mxu0 0.0
        %531 = vmatpush1.xpose.msra.mxu0 0.0
        %532 = vmatprep.subr.mxu0 0.0
        %533 = vmatpush1.xpose.msra.mxu0 0.0
        %534 = vmatprep.subr.mxu0 0.0
        %535 = vmatpush1.xpose.msra.mxu0 0.0
        %536 = vmatprep.subr.mxu0 0.0
        %537 = vmatpush1.xpose.msra.mxu0 0.0
        %538 = vmatprep.subr.mxu0 0.0
        %539 = vmatpush1.xpose.msra.mxu0 0.0
        %540 = vmatprep.subr.mxu0 0.0
        %541 = vmatpush1.xpose.msra.mxu0 0.0
        %542 = vmatprep.subr.mxu0 0.0
        %543 = vmatpush1.xpose.msra.mxu0 0.0
        %544 = vmatprep.subr.mxu0 0.0
        %545 = vmatpush1.xpose.msra.mxu0 0.0
        %546 = vmatprep.mubr.f32.mxu0 0.0
        %547 = vmatmul.mubr.f32.gmra.mrb[0].mxu0 %v453
        %v548 = vpop.f32.mrb[0].mxu0
        %v549 = vadd.f32 0.0, %v548
        %v550 = vpop.f32.mrb[0].mxu0
        %551 = vmatprep.mubr.f32.mxu0 0.0
        %552 = vmatmul.mubr.f32.gmra.mrb[0].mxu0 %v456
        %v553 = vpop.f32.mrb[0].mxu0
        %v554 = vadd.f32 0.0, %v553
        %v555 = vpop.f32.mrb[0].mxu0
        %556 = vmatprep.mubr.f32.mxu0 0.0
        %557 = vmatmul.mubr.f32.gmra.mrb[0].mxu0 %v459
        %v558 = vpop.f32.mrb[0].mxu0
        %v559 = vadd.f32 0.0, %v558
        %v560 = vpop.f32.mrb[0].mxu0
        %561 = vmatprep.mubr.f32.mxu0 0.0
        %562 = vmatmul.mubr.f32.gmra.mrb[0].mxu0 %v462
        %v563 = vpop.f32.mrb[0].mxu0
        %v564 = vadd.f32 0.0, %v563
        %v565 = vpop.f32.mrb[0].mxu0
        %566 = vmatprep.mubr.f32.mxu0 0.0
        %567 = vmatmul.mubr.f32.gmra.mrb[0].mxu0 %v465
        %v568 = vpop.f32.mrb[0].mxu0
        %v569 = vadd.f32 0.0, %v568
        %v570 = vpop.f32.mrb[0].mxu0
        %571 = vmatprep.mubr.f32.mxu0 0.0
        %572 = vmatmul.mubr.f32.gmra.mrb[0].mxu0 %v468
        %v573 = vpop.f32.mrb[0].mxu0
        %v574 = vadd.f32 0.0, %v573
        %v575 = vpop.f32.mrb[0].mxu0
        %576 = vmatprep.mubr.f32.mxu0 0.0
        %577 = vmatmul.mubr.f32.gmra.mrb[0].mxu0 %v471
        %v578 = vpop.f32.mrb[0].mxu0
        %v579 = vadd.f32 0.0, %v578
        %v580 = vpop.f32.mrb[0].mxu0
        %581 = vmatprep.mubr.f32.mxu0 0.0
        %582 = vmatmul.mubr.f32.gmra.mrb[0].mxu0 %v474
        %v583 = vpop.f32.mrb[0].mxu0
        %v584 = vadd.f32 0.0, %v583
        %v585 = vpop.f32.mrb[0].mxu0
        %586 = vdwg.mxu0
        %587 = vrot.lane.b32.xlu0 %v443, 124
        %v588 = vpop.permute.xlu0 %587
        %589 = vrot.lane.b32.xlu0 %v448, 124
        %v590 = vpop.permute.xlu0 %589
        %v591 = vsel %vm451, %v588, 0
        %v593 = vsel %vm451, %v590, 0
        %595 = vmatprep.subr.mxu0 0.0
        %596 = vmatpush1.xpose.msra.mxu0 %v591
        %597 = vmatprep.subr.mxu0 0.0
        %598 = vmatpush1.xpose.msra.mxu0 %v593
        %599 = vmatprep.subr.mxu0 0.0
        %600 = vmatpush1.xpose.msra.mxu0 0.0
        %601 = vmatprep.subr.mxu0 0.0
        %602 = vmatpush1.xpose.msra.mxu0 0.0
        %603 = vmatprep.subr.mxu0 0.0
        %604 = vmatpush1.xpose.msra.mxu0 0.0
        %605 = vmatprep.subr.mxu0 0.0
        %606 = vmatpush1.xpose.msra.mxu0 0.0
        %607 = vmatprep.subr.mxu0 0.0
        %608 = vmatpush1.xpose.msra.mxu0 0.0
        %609 = vmatprep.subr.mxu0 0.0
        %610 = vmatpush1.xpose.msra.mxu0 0.0
        %611 = vmatprep.subr.mxu0 0.0
        %612 = vmatpush1.xpose.msra.mxu0 0.0
        %613 = vmatprep.subr.mxu0 0.0
        %614 = vmatpush1.xpose.msra.mxu0 0.0
        %615 = vmatprep.subr.mxu0 0.0
        %616 = vmatpush1.xpose.msra.mxu0 0.0
        %617 = vmatprep.subr.mxu0 0.0
        %618 = vmatpush1.xpose.msra.mxu0 0.0
        %619 = vmatprep.subr.mxu0 0.0
        %620 = vmatpush1.xpose.msra.mxu0 0.0
        %621 = vmatprep.subr.mxu0 0.0
        %622 = vmatpush1.xpose.msra.mxu0 0.0
        %623 = vmatprep.subr.mxu0 0.0
        %624 = vmatpush1.xpose.msra.mxu0 0.0
        %625 = vmatprep.subr.mxu0 0.0
        %626 = vmatpush1.xpose.msra.mxu0 0.0
        %627 = vmatprep.subr.mxu0 0.0
        %628 = vmatpush1.xpose.msra.mxu0 0.0
        %629 = vmatprep.subr.mxu0 0.0
        %630 = vmatpush1.xpose.msra.mxu0 0.0
        %631 = vmatprep.subr.mxu0 0.0
        %632 = vmatpush1.xpose.msra.mxu0 0.0
        %633 = vmatprep.subr.mxu0 0.0
        %634 = vmatpush1.xpose.msra.mxu0 0.0
        %635 = vmatprep.subr.mxu0 0.0
        %636 = vmatpush1.xpose.msra.mxu0 0.0
        %637 = vmatprep.subr.mxu0 0.0
        %638 = vmatpush1.xpose.msra.mxu0 0.0
        %639 = vmatprep.subr.mxu0 0.0
        %640 = vmatpush1.xpose.msra.mxu0 0.0
        %641 = vmatprep.subr.mxu0 0.0
        %642 = vmatpush1.xpose.msra.mxu0 0.0
        %643 = vmatprep.subr.mxu0 0.0
        %644 = vmatpush1.xpose.msra.mxu0 0.0
        %645 = vmatprep.subr.mxu0 0.0
        %646 = vmatpush1.xpose.msra.mxu0 0.0
        %647 = vmatprep.subr.mxu0 0.0
        %648 = vmatpush1.xpose.msra.mxu0 0.0
        %649 = vmatprep.subr.mxu0 0.0
        %650 = vmatpush1.xpose.msra.mxu0 0.0
        %651 = vmatprep.subr.mxu0 0.0
        %652 = vmatpush1.xpose.msra.mxu0 0.0
        %653 = vmatprep.subr.mxu0 0.0
        %654 = vmatpush1.xpose.msra.mxu0 0.0
        %655 = vmatprep.subr.mxu0 0.0
        %656 = vmatpush1.xpose.msra.mxu0 0.0
        %657 = vmatprep.subr.mxu0 0.0
        %658 = vmatpush1.xpose.msra.mxu0 0.0
        %659 = vmatprep.mubr.f32.mxu0 0.0
        %660 = vmatmul.mubr.f32.gmra.mrb[0].mxu0 %v453
        %v661 = vpop.f32.mrb[0].mxu0
        %v662 = vadd.f32 0.0, %v661
        %v663 = vpop.f32.mrb[0].mxu0
        %664 = vmatprep.mubr.f32.mxu0 0.0
        %665 = vmatmul.mubr.f32.gmra.mrb[0].mxu0 %v456
        %v666 = vpop.f32.mrb[0].mxu0
        %v667 = vadd.f32 0.0, %v666
        %v668 = vpop.f32.mrb[0].mxu0
        %669 = vmatprep.mubr.f32.mxu0 0.0
        %670 = vmatmul.mubr.f32.gmra.mrb[0].mxu0 %v459
        %v671 = vpop.f32.mrb[0].mxu0
        %v672 = vadd.f32 0.0, %v671
        %v673 = vpop.f32.mrb[0].mxu0
        %674 = vmatprep.mubr.f32.mxu0 0.0
        %675 = vmatmul.mubr.f32.gmra.mrb[0].mxu0 %v462
        %v676 = vpop.f32.mrb[0].mxu0
        %v677 = vadd.f32 0.0, %v676
        %v678 = vpop.f32.mrb[0].mxu0
        %679 = vmatprep.mubr.f32.mxu0 0.0
        %680 = vmatmul.mubr.f32.gmra.mrb[0].mxu0 %v465
        %v681 = vpop.f32.mrb[0].mxu0
        %v682 = vadd.f32 0.0, %v681
        %v683 = vpop.f32.mrb[0].mxu0
        %684 = vmatprep.mubr.f32.mxu0 0.0
        %685 = vmatmul.mubr.f32.gmra.mrb[0].mxu0 %v468
        %v686 = vpop.f32.mrb[0].mxu0
        %v687 = vadd.f32 0.0, %v686
        %v688 = vpop.f32.mrb[0].mxu0
        %689 = vmatprep.mubr.f32.mxu0 0.0
        %690 = vmatmul.mubr.f32.gmra.mrb[0].mxu0 %v471
        %v691 = vpop.f32.mrb[0].mxu0
        %v692 = vadd.f32 0.0, %v691
        %v693 = vpop.f32.mrb[0].mxu0
        %694 = vmatprep.mubr.f32.mxu0 0.0
        %695 = vmatmul.mubr.f32.gmra.mrb[0].mxu0 %v474
        %v696 = vpop.f32.mrb[0].mxu0
        %v697 = vadd.f32 0.0, %v696
        %v698 = vpop.f32.mrb[0].mxu0
        %699 = vdwg.mxu0
        %v700 = vmul.f32 %v662, %v265
        %v701 = vmul.f32 %v667, %v266
        %v702 = vmul.f32 %v672, %v267
        %v703 = vmul.f32 %v677, %v268
        %v704 = vmul.f32 %v682, %v269
        %v705 = vmul.f32 %v687, %v270
        %v706 = vmul.f32 %v692, %v271
        %v707 = vmul.f32 %v697, %v272
        %v708 = vsel %vm287, %v700, 0.0
        %709 = vadd.xlane.f32.xlu0 %v708
        %v710 = vpop.xlane.xlu0 %709
        %v711 = vsel %vm287, %v701, 0.0
        %712 = vadd.xlane.f32.xlu0 %v711
        %v713 = vpop.xlane.xlu0 %712
        %v714 = vsel %vm287, %v702, 0.0
        %715 = vadd.xlane.f32.xlu0 %v714
        %v716 = vpop.xlane.xlu0 %715
        %v717 = vsel %vm287, %v703, 0.0
        %718 = vadd.xlane.f32.xlu0 %v717
        %v719 = vpop.xlane.xlu0 %718
        %v720 = vsel %vm287, %v704, 0.0
        %721 = vadd.xlane.f32.xlu0 %v720
        %v722 = vpop.xlane.xlu0 %721
        %v723 = vsel %vm287, %v705, 0.0
        %724 = vadd.xlane.f32.xlu0 %v723
        %v725 = vpop.xlane.xlu0 %724
        %v726 = vsel %vm287, %v706, 0.0
        %727 = vadd.xlane.f32.xlu0 %v726
        %v728 = vpop.xlane.xlu0 %727
        %v729 = vsel %vm287, %v707, 0.0
        %730 = vadd.xlane.f32.xlu0 %v729
        %v731 = vpop.xlane.xlu0 %730
        %v733 = vsel %vm287, %v265, 0
        %v736 = vsel %vm287, %v266, 0
        %v739 = vsel %vm287, %v267, 0
        %v742 = vsel %vm287, %v268, 0
        %v745 = vsel %vm287, %v269, 0
        %v748 = vsel %vm287, %v270, 0
        %v751 = vsel %vm287, %v271, 0
        %v754 = vsel %vm287, %v272, 0
        %756 = vmatprep.subr.mxu0 0.0
        %757 = vmatpush1.msra.mxu0 %v247
        %758 = vmatprep.subr.mxu0 0.0
        %759 = vmatpush1.msra.mxu0 %v248
        %760 = vmatprep.subr.mxu0 0.0
        %761 = vmatpush1.msra.mxu0 0.0
        %762 = vmatprep.subr.mxu0 0.0
        %763 = vmatpush1.msra.mxu0 0.0
        %764 = vmatprep.subr.mxu0 0.0
        %765 = vmatpush1.msra.mxu0 0.0
        %766 = vmatprep.subr.mxu0 0.0
        %767 = vmatpush1.msra.mxu0 0.0
        %768 = vmatprep.subr.mxu0 0.0
        %769 = vmatpush1.msra.mxu0 0.0
        %770 = vmatprep.subr.mxu0 0.0
        %771 = vmatpush1.msra.mxu0 0.0
        %772 = vmatprep.subr.mxu0 0.0
        %773 = vmatpush1.msra.mxu0 0.0
        %774 = vmatprep.subr.mxu0 0.0
        %775 = vmatpush1.msra.mxu0 0.0
        %776 = vmatprep.subr.mxu0 0.0
        %777 = vmatpush1.msra.mxu0 0.0
        %778 = vmatprep.subr.mxu0 0.0
        %779 = vmatpush1.msra.mxu0 0.0
        %780 = vmatprep.subr.mxu0 0.0
        %781 = vmatpush1.msra.mxu0 0.0
        %782 = vmatprep.subr.mxu0 0.0
        %783 = vmatpush1.msra.mxu0 0.0
        %784 = vmatprep.subr.mxu0 0.0
        %785 = vmatpush1.msra.mxu0 0.0
        %786 = vmatprep.subr.mxu0 0.0
        %787 = vmatpush1.msra.mxu0 0.0
        %788 = vmatprep.subr.mxu0 0.0
        %789 = vmatpush1.msra.mxu0 0.0
        %790 = vmatprep.subr.mxu0 0.0
        %791 = vmatpush1.msra.mxu0 0.0
        %792 = vmatprep.subr.mxu0 0.0
        %793 = vmatpush1.msra.mxu0 0.0
        %794 = vmatprep.subr.mxu0 0.0
        %795 = vmatpush1.msra.mxu0 0.0
        %796 = vmatprep.subr.mxu0 0.0
        %797 = vmatpush1.msra.mxu0 0.0
        %798 = vmatprep.subr.mxu0 0.0
        %799 = vmatpush1.msra.mxu0 0.0
        %800 = vmatprep.subr.mxu0 0.0
        %801 = vmatpush1.msra.mxu0 0.0
        %802 = vmatprep.subr.mxu0 0.0
        %803 = vmatpush1.msra.mxu0 0.0
        %804 = vmatprep.subr.mxu0 0.0
        %805 = vmatpush1.msra.mxu0 0.0
        %806 = vmatprep.subr.mxu0 0.0
        %807 = vmatpush1.msra.mxu0 0.0
        %808 = vmatprep.subr.mxu0 0.0
        %809 = vmatpush1.msra.mxu0 0.0
        %810 = vmatprep.subr.mxu0 0.0
        %811 = vmatpush1.msra.mxu0 0.0
        %812 = vmatprep.subr.mxu0 0.0
        %813 = vmatpush1.msra.mxu0 0.0
        %814 = vmatprep.subr.mxu0 0.0
        %815 = vmatpush1.msra.mxu0 0.0
        %816 = vmatprep.subr.mxu0 0.0
        %817 = vmatpush1.msra.mxu0 0.0
        %818 = vmatprep.subr.mxu0 0.0
        %819 = vmatpush1.msra.mxu0 0.0
        %820 = vmatprep.mubr.f32.mxu0 0.0
        %821 = vmatmul.mubr.f32.gmra.mrb[0].mxu0 %v733
        %v822 = vpop.f32.mrb[0].mxu0
        %v823 = vadd.f32 0.0, %v822
        %v824 = vpop.f32.mrb[0].mxu0
        %825 = vmatprep.mubr.f32.mxu0 0.0
        %826 = vmatmul.mubr.f32.gmra.mrb[0].mxu0 %v736
        %v827 = vpop.f32.mrb[0].mxu0
        %v828 = vadd.f32 0.0, %v827
        %v829 = vpop.f32.mrb[0].mxu0
        %830 = vmatprep.mubr.f32.mxu0 0.0
        %831 = vmatmul.mubr.f32.gmra.mrb[0].mxu0 %v739
        %v832 = vpop.f32.mrb[0].mxu0
        %v833 = vadd.f32 0.0, %v832
        %v834 = vpop.f32.mrb[0].mxu0
        %835 = vmatprep.mubr.f32.mxu0 0.0
        %836 = vmatmul.mubr.f32.gmra.mrb[0].mxu0 %v742
        %v837 = vpop.f32.mrb[0].mxu0
        %v838 = vadd.f32 0.0, %v837
        %v839 = vpop.f32.mrb[0].mxu0
        %840 = vmatprep.mubr.f32.mxu0 0.0
        %841 = vmatmul.mubr.f32.gmra.mrb[0].mxu0 %v745
        %v842 = vpop.f32.mrb[0].mxu0
        %v843 = vadd.f32 0.0, %v842
        %v844 = vpop.f32.mrb[0].mxu0
        %845 = vmatprep.mubr.f32.mxu0 0.0
        %846 = vmatmul.mubr.f32.gmra.mrb[0].mxu0 %v748
        %v847 = vpop.f32.mrb[0].mxu0
        %v848 = vadd.f32 0.0, %v847
        %v849 = vpop.f32.mrb[0].mxu0
        %850 = vmatprep.mubr.f32.mxu0 0.0
        %851 = vmatmul.mubr.f32.gmra.mrb[0].mxu0 %v751
        %v852 = vpop.f32.mrb[0].mxu0
        %v853 = vadd.f32 0.0, %v852
        %v854 = vpop.f32.mrb[0].mxu0
        %855 = vmatprep.mubr.f32.mxu0 0.0
        %856 = vmatmul.mubr.f32.gmra.mrb[0].mxu0 %v754
        %v857 = vpop.f32.mrb[0].mxu0
        %v858 = vadd.f32 0.0, %v857
        %v859 = vpop.f32.mrb[0].mxu0
        %860 = vdwg.mxu0
        %v861 = vadd.f32 %v710, %v549
        %v862 = vadd.f32 %v713, %v554
        %v863 = vadd.f32 %v716, %v559
        %v864 = vadd.f32 %v719, %v564
        %v865 = vadd.f32 %v722, %v569
        %v866 = vadd.f32 %v725, %v574
        %v867 = vadd.f32 %v728, %v579
        %v868 = vadd.f32 %v731, %v584
        %vm869 = vcmp.gt.f32.partialorder %v861, 0.0
        %vm870 = vcmp.gt.f32.partialorder %v862, 0.0
        %vm871 = vcmp.gt.f32.partialorder %v863, 0.0
        %vm872 = vcmp.gt.f32.partialorder %v864, 0.0
        %vm873 = vcmp.gt.f32.partialorder %v865, 0.0
        %vm874 = vcmp.gt.f32.partialorder %v866, 0.0
        %vm875 = vcmp.gt.f32.partialorder %v867, 0.0
        %vm876 = vcmp.gt.f32.partialorder %v868, 0.0
        %v877 = vmul.f32 %v861, 0.2
        %v878 = vmul.f32 %v862, 0.2
        %v879 = vmul.f32 %v863, 0.2
        %v880 = vmul.f32 %v864, 0.2
        %v881 = vmul.f32 %v865, 0.2
        %v882 = vmul.f32 %v866, 0.2
        %v883 = vmul.f32 %v867, 0.2
        %v884 = vmul.f32 %v868, 0.2
        %v885 = vsel %vm869, %v861, %v877
        %v886 = vsel %vm870, %v862, %v878
        %v887 = vsel %vm871, %v863, %v879
        %v888 = vsel %vm872, %v864, %v880
        %v889 = vsel %vm873, %v865, %v881
        %v890 = vsel %vm874, %v866, %v882
        %v891 = vsel %vm875, %v867, %v883
        %v892 = vsel %vm876, %v868, %v884
        %v893 = vadd.f32 %v885, %v823
        %v894 = vadd.f32 %v886, %v828
        %v895 = vadd.f32 %v887, %v833
        %v896 = vadd.f32 %v888, %v838
        %v897 = vadd.f32 %v889, %v843
        %v898 = vadd.f32 %v890, %v848
        %v899 = vadd.f32 %v891, %v853
        %v900 = vadd.f32 %v892, %v858
        %v901 = vsel %vm287, %v893, -inf
        %902 = vmax.xlane.f32.xlu0 %v901
        %v903 = vpop.xlane.xlu0 %902
        %v904 = vsel %vm287, %v894, -inf
        %905 = vmax.xlane.f32.xlu0 %v904
        %v906 = vpop.xlane.xlu0 %905
        %v907 = vsel %vm287, %v895, -inf
        %908 = vmax.xlane.f32.xlu0 %v907
        %v909 = vpop.xlane.xlu0 %908
        %v910 = vsel %vm287, %v896, -inf
        %911 = vmax.xlane.f32.xlu0 %v910
        %v912 = vpop.xlane.xlu0 %911
        %v913 = vsel %vm287, %v897, -inf
        %914 = vmax.xlane.f32.xlu0 %v913
        %v915 = vpop.xlane.xlu0 %914
        %v916 = vsel %vm287, %v898, -inf
        %917 = vmax.xlane.f32.xlu0 %v916
        %v918 = vpop.xlane.xlu0 %917
        %v919 = vsel %vm287, %v899, -inf
        %920 = vmax.xlane.f32.xlu0 %v919
        %v921 = vpop.xlane.xlu0 %920
        %v922 = vsel %vm287, %v900, -inf
        %923 = vmax.xlane.f32.xlu0 %v922
        %v924 = vpop.xlane.xlu0 %923
        %v925 = vsub.f32 %v893, %v903
        %v926 = vsub.f32 %v894, %v906
        %v927 = vsub.f32 %v895, %v909
        %v928 = vsub.f32 %v896, %v912
        %v929 = vsub.f32 %v897, %v915
        %v930 = vsub.f32 %v898, %v918
        %v931 = vsub.f32 %v899, %v921
        %v932 = vsub.f32 %v900, %v924
        %v933 = vmul.f32 %v925, 1.442695
        %v934 = vpow.pop %v933
        %v935 = vmul.f32 %v926, 1.442695
        %v936 = vpow.pop %v935
        %v937 = vmul.f32 %v927, 1.442695
        %v938 = vpow.pop %v937
        %v939 = vmul.f32 %v928, 1.442695
        %v940 = vpow.pop %v939
        %v941 = vmul.f32 %v929, 1.442695
        %v942 = vpow.pop %v941
        %v943 = vmul.f32 %v930, 1.442695
        %v944 = vpow.pop %v943
        %v945 = vmul.f32 %v931, 1.442695
        %v946 = vpow.pop %v945
        %v947 = vmul.f32 %v932, 1.442695
        %v948 = vpow.pop %v947
        %v949 = vsel %vm287, %v934, 0.0
        %950 = vadd.xlane.f32.xlu0 %v949
        %v951 = vpop.xlane.xlu0 %950
        %v952 = vsel %vm287, %v936, 0.0
        %953 = vadd.xlane.f32.xlu0 %v952
        %v954 = vpop.xlane.xlu0 %953
        %v955 = vsel %vm287, %v938, 0.0
        %956 = vadd.xlane.f32.xlu0 %v955
        %v957 = vpop.xlane.xlu0 %956
        %v958 = vsel %vm287, %v940, 0.0
        %959 = vadd.xlane.f32.xlu0 %v958
        %v960 = vpop.xlane.xlu0 %959
        %v961 = vsel %vm287, %v942, 0.0
        %962 = vadd.xlane.f32.xlu0 %v961
        %v963 = vpop.xlane.xlu0 %962
        %v964 = vsel %vm287, %v944, 0.0
        %965 = vadd.xlane.f32.xlu0 %v964
        %v966 = vpop.xlane.xlu0 %965
        %v967 = vsel %vm287, %v946, 0.0
        %968 = vadd.xlane.f32.xlu0 %v967
        %v969 = vpop.xlane.xlu0 %968
        %v970 = vsel %vm287, %v948, 0.0
        %971 = vadd.xlane.f32.xlu0 %v970
        %v972 = vpop.xlane.xlu0 %971
        %v973 = vrcp.pop %v951
        %v974 = vrcp.pop %v954
        %v975 = vrcp.pop %v957
        %v976 = vrcp.pop %v960
        %v977 = vrcp.pop %v963
        %v978 = vrcp.pop %v966
        %v979 = vrcp.pop %v969
        %v980 = vrcp.pop %v972
        %v981 = vmul.f32 %v934, %v973
        %v982 = vmul.f32 %v936, %v974
        %v983 = vmul.f32 %v938, %v975
        %v984 = vmul.f32 %v940, %v976
        %v985 = vmul.f32 %v942, %v977
        %v986 = vmul.f32 %v944, %v978
        %v987 = vmul.f32 %v946, %v979
        %v988 = vmul.f32 %v948, %v980
        %v990 = vsel %vm287, %v981, 0
        %v993 = vsel %vm287, %v982, 0
        %v996 = vsel %vm287, %v983, 0
        %v999 = vsel %vm287, %v984, 0
        %v1002 = vsel %vm287, %v985, 0
        %v1005 = vsel %vm287, %v986, 0
        %v1008 = vsel %vm287, %v987, 0
        %v1011 = vsel %vm287, %v988, 0
        %1013 = vmatprep.subr.mxu0 0.0
        %1014 = vmatpush1.msra.mxu0 %v361
        %1015 = vmatprep.subr.mxu0 0.0
        %1016 = vmatpush1.msra.mxu0 %v366
        %1017 = vmatprep.subr.mxu0 0.0
        %1018 = vmatpush1.msra.mxu0 0.0
        %1019 = vmatprep.subr.mxu0 0.0
        %1020 = vmatpush1.msra.mxu0 0.0
        %1021 = vmatprep.subr.mxu0 0.0
        %1022 = vmatpush1.msra.mxu0 0.0
        %1023 = vmatprep.subr.mxu0 0.0
        %1024 = vmatpush1.msra.mxu0 0.0
        %1025 = vmatprep.subr.mxu0 0.0
        %1026 = vmatpush1.msra.mxu0 0.0
        %1027 = vmatprep.subr.mxu0 0.0
        %1028 = vmatpush1.msra.mxu0 0.0
        %1029 = vmatprep.subr.mxu0 0.0
        %1030 = vmatpush1.msra.mxu0 0.0
        %1031 = vmatprep.subr.mxu0 0.0
        %1032 = vmatpush1.msra.mxu0 0.0
        %1033 = vmatprep.subr.mxu0 0.0
        %1034 = vmatpush1.msra.mxu0 0.0
        %1035 = vmatprep.subr.mxu0 0.0
        %1036 = vmatpush1.msra.mxu0 0.0
        %1037 = vmatprep.subr.mxu0 0.0
        %1038 = vmatpush1.msra.mxu0 0.0
        %1039 = vmatprep.subr.mxu0 0.0
        %1040 = vmatpush1.msra.mxu0 0.0
        %1041 = vmatprep.subr.mxu0 0.0
        %1042 = vmatpush1.msra.mxu0 0.0
        %1043 = vmatprep.subr.mxu0 0.0
        %1044 = vmatpush1.msra.mxu0 0.0
        %1045 = vmatprep.subr.mxu0 0.0
        %1046 = vmatpush1.msra.mxu0 0.0
        %1047 = vmatprep.subr.mxu0 0.0
        %1048 = vmatpush1.msra.mxu0 0.0
        %1049 = vmatprep.subr.mxu0 0.0
        %1050 = vmatpush1.msra.mxu0 0.0
        %1051 = vmatprep.subr.mxu0 0.0
        %1052 = vmatpush1.msra.mxu0 0.0
        %1053 = vmatprep.subr.mxu0 0.0
        %1054 = vmatpush1.msra.mxu0 0.0
        %1055 = vmatprep.subr.mxu0 0.0
        %1056 = vmatpush1.msra.mxu0 0.0
        %1057 = vmatprep.subr.mxu0 0.0
        %1058 = vmatpush1.msra.mxu0 0.0
        %1059 = vmatprep.subr.mxu0 0.0
        %1060 = vmatpush1.msra.mxu0 0.0
        %1061 = vmatprep.subr.mxu0 0.0
        %1062 = vmatpush1.msra.mxu0 0.0
        %1063 = vmatprep.subr.mxu0 0.0
        %1064 = vmatpush1.msra.mxu0 0.0
        %1065 = vmatprep.subr.mxu0 0.0
        %1066 = vmatpush1.msra.mxu0 0.0
        %1067 = vmatprep.subr.mxu0 0.0
        %1068 = vmatpush1.msra.mxu0 0.0
        %1069 = vmatprep.subr.mxu0 0.0
        %1070 = vmatpush1.msra.mxu0 0.0
        %1071 = vmatprep.subr.mxu0 0.0
        %1072 = vmatpush1.msra.mxu0 0.0
        %1073 = vmatprep.subr.mxu0 0.0
        %1074 = vmatpush1.msra.mxu0 0.0
        %1075 = vmatprep.subr.mxu0 0.0
        %1076 = vmatpush1.msra.mxu0 0.0
        %1077 = vmatprep.mubr.f32.mxu0 0.0
        %1078 = vmatmul.mubr.f32.gmra.mrb[0].mxu0 %v990
        %v1079 = vpop.f32.mrb[0].mxu0
        %v1080 = vadd.f32 0.0, %v1079
        %v1081 = vpop.f32.mrb[0].mxu0
        %1082 = vmatprep.mubr.f32.mxu0 0.0
        %1083 = vmatmul.mubr.f32.gmra.mrb[0].mxu0 %v993
        %v1084 = vpop.f32.mrb[0].mxu0
        %v1085 = vadd.f32 0.0, %v1084
        %v1086 = vpop.f32.mrb[0].mxu0
        %1087 = vmatprep.mubr.f32.mxu0 0.0
        %1088 = vmatmul.mubr.f32.gmra.mrb[0].mxu0 %v996
        %v1089 = vpop.f32.mrb[0].mxu0
        %v1090 = vadd.f32 0.0, %v1089
        %v1091 = vpop.f32.mrb[0].mxu0
        %1092 = vmatprep.mubr.f32.mxu0 0.0
        %1093 = vmatmul.mubr.f32.gmra.mrb[0].mxu0 %v999
        %v1094 = vpop.f32.mrb[0].mxu0
        %v1095 = vadd.f32 0.0, %v1094
        %v1096 = vpop.f32.mrb[0].mxu0
        %1097 = vmatprep.mubr.f32.mxu0 0.0
        %1098 = vmatmul.mubr.f32.gmra.mrb[0].mxu0 %v1002
        %v1099 = vpop.f32.mrb[0].mxu0
        %v1100 = vadd.f32 0.0, %v1099
        %v1101 = vpop.f32.mrb[0].mxu0
        %1102 = vmatprep.mubr.f32.mxu0 0.0
        %1103 = vmatmul.mubr.f32.gmra.mrb[0].mxu0 %v1005
        %v1104 = vpop.f32.mrb[0].mxu0
        %v1105 = vadd.f32 0.0, %v1104
        %v1106 = vpop.f32.mrb[0].mxu0
        %1107 = vmatprep.mubr.f32.mxu0 0.0
        %1108 = vmatmul.mubr.f32.gmra.mrb[0].mxu0 %v1008
        %v1109 = vpop.f32.mrb[0].mxu0
        %v1110 = vadd.f32 0.0, %v1109
        %v1111 = vpop.f32.mrb[0].mxu0
        %1112 = vmatprep.mubr.f32.mxu0 0.0
        %1113 = vmatmul.mubr.f32.gmra.mrb[0].mxu0 %v1011
        %v1114 = vpop.f32.mrb[0].mxu0
        %v1115 = vadd.f32 0.0, %v1114
        %v1116 = vpop.f32.mrb[0].mxu0
        %1117 = vdwg.mxu0
        %v1118 = vlaneseq
        %v1119 = vshrl.u32 %v1118, 7
        %v1120 = vsub.s32 0, %v1119
        %v1121 = vrot.slane %v256, %v1120
        %v1122 = vmul.f32 %v1080, %v1121
        %v1123 = vmul.f32 %v1085, %v1121
        %v1124 = vlaneseq
        %v1125 = vshrl.u32 %v1124, 7
        %v1126 = vsub.s32 1, %v1125
        %v1127 = vrot.slane %v256, %v1126
        %v1128 = vmul.f32 %v1090, %v1127
        %v1129 = vmul.f32 %v1095, %v1127
        %v1130 = vadd.f32 %v1122, %v1128
        %v1131 = vadd.f32 %v1123, %v1129
        %v1132 = vlaneseq
        %v1133 = vshrl.u32 %v1132, 7
        %v1134 = vsub.s32 2, %v1133
        %v1135 = vrot.slane %v256, %v1134
        %v1136 = vmul.f32 %v1100, %v1135
        %v1137 = vmul.f32 %v1105, %v1135
        %v1138 = vadd.f32 %v1130, %v1136
        %v1139 = vadd.f32 %v1131, %v1137
        %v1140 = vlaneseq
        %v1141 = vshrl.u32 %v1140, 7
        %v1142 = vsub.s32 3, %v1141
        %v1143 = vrot.slane %v256, %v1142
        %v1144 = vmul.f32 %v1110, %v1143
        %v1145 = vmul.f32 %v1115, %v1143
        %v1146 = vadd.f32 %v1138, %v1144
        %v1147 = vadd.f32 %v1139, %v1145
        %v1148 = vlaneseq
        %v1149 = vshrl.u32 %v1148, 7
        %v1150 = vsub.s32 0, %v1149
        %v1151 = vrot.slane %v255, %v1150
        %v1152 = vadd.f32 %v1146, %v1151
        %v1153 = vadd.f32 %v1147, %v1151
        %v1155 = vsel %vm369, %v1152, 0
        %v1158 = vsel %vm369, %v1153, 0
        %1160 = vmatprep.subr.mxu0 0.0
        %1161 = vmatpush1.msra.mxu0 %v273
        %1162 = vmatprep.subr.mxu0 0.0
        %1163 = vmatpush1.msra.mxu0 %v274
        %1164 = vmatprep.subr.mxu0 0.0
        %1165 = vmatpush1.msra.mxu0 %v275
        %1166 = vmatprep.subr.mxu0 0.0
        %1167 = vmatpush1.msra.mxu0 %v276
        %1168 = vmatprep.subr.mxu0 0.0
        %1169 = vmatpush1.msra.mxu0 0.0
        %1170 = vmatprep.subr.mxu0 0.0
        %1171 = vmatpush1.msra.mxu0 0.0
        %1172 = vmatprep.subr.mxu0 0.0
        %1173 = vmatpush1.msra.mxu0 0.0
        %1174 = vmatprep.subr.mxu0 0.0
        %1175 = vmatpush1.msra.mxu0 0.0
        %1176 = vmatprep.subr.mxu0 0.0
        %1177 = vmatpush1.msra.mxu0 0.0
        %1178 = vmatprep.subr.mxu0 0.0
        %1179 = vmatpush1.msra.mxu0 0.0
        %1180 = vmatprep.subr.mxu0 0.0
        %1181 = vmatpush1.msra.mxu0 0.0
        %1182 = vmatprep.subr.mxu0 0.0
        %1183 = vmatpush1.msra.mxu0 0.0
        %1184 = vmatprep.subr.mxu0 0.0
        %1185 = vmatpush1.msra.mxu0 0.0
        %1186 = vmatprep.subr.mxu0 0.0
        %1187 = vmatpush1.msra.mxu0 0.0
        %1188 = vmatprep.subr.mxu0 0.0
        %1189 = vmatpush1.msra.mxu0 0.0
        %1190 = vmatprep.subr.mxu0 0.0
        %1191 = vmatpush1.msra.mxu0 0.0
        %1192 = vmatprep.subr.mxu0 0.0
        %1193 = vmatpush1.msra.mxu0 0.0
        %1194 = vmatprep.subr.mxu0 0.0
        %1195 = vmatpush1.msra.mxu0 0.0
        %1196 = vmatprep.subr.mxu0 0.0
        %1197 = vmatpush1.msra.mxu0 0.0
        %1198 = vmatprep.subr.mxu0 0.0
        %1199 = vmatpush1.msra.mxu0 0.0
        %1200 = vmatprep.subr.mxu0 0.0
        %1201 = vmatpush1.msra.mxu0 0.0
        %1202 = vmatprep.subr.mxu0 0.0
        %1203 = vmatpush1.msra.mxu0 0.0
        %1204 = vmatprep.subr.mxu0 0.0
        %1205 = vmatpush1.msra.mxu0 0.0
        %1206 = vmatprep.subr.mxu0 0.0
        %1207 = vmatpush1.msra.mxu0 0.0
        %1208 = vmatprep.subr.mxu0 0.0
        %1209 = vmatpush1.msra.mxu0 0.0
        %1210 = vmatprep.subr.mxu0 0.0
        %1211 = vmatpush1.msra.mxu0 0.0
        %1212 = vmatprep.subr.mxu0 0.0
        %1213 = vmatpush1.msra.mxu0 0.0
        %1214 = vmatprep.subr.mxu0 0.0
        %1215 = vmatpush1.msra.mxu0 0.0
        %1216 = vmatprep.subr.mxu0 0.0
        %1217 = vmatpush1.msra.mxu0 0.0
        %1218 = vmatprep.subr.mxu0 0.0
        %1219 = vmatpush1.msra.mxu0 0.0
        %1220 = vmatprep.subr.mxu0 0.0
        %1221 = vmatpush1.msra.mxu0 0.0
        %1222 = vmatprep.subr.mxu0 0.0
        %1223 = vmatpush1.msra.mxu0 0.0
        %1224 = vmatprep.mubr.f32.mxu0 0.0
        %1225 = vmatmul.mubr.f32.gmra.mrb[0].mxu0 %v1155
        %v1226 = vpop.f32.mrb[0].mxu0
        %v1227 = vadd.f32 0.0, %v1226
        %v1228 = vpop.f32.mrb[0].mxu0
        %1229 = vmatprep.mubr.f32.mxu0 0.0
        %1230 = vmatmul.mubr.f32.gmra.mrb[0].mxu0 %v1158
        %v1231 = vpop.f32.mrb[0].mxu0
        %v1232 = vadd.f32 0.0, %v1231
        %v1233 = vpop.f32.mrb[0].mxu0
        %1234 = vdwg.mxu0
        %vm1235 = vcmask 64512
        %v1237 = vsel %vm1235, %v1227, 0
        %v1240 = vsel %vm1235, %v1232, 0
        %1242 = vmatprep.subr.mxu0 0.0
        %1243 = vmatpush1.msra.mxu0 %v277
        %1244 = vmatprep.subr.mxu0 0.0
        %1245 = vmatpush1.msra.mxu0 0.0
        %1246 = vmatprep.subr.mxu0 0.0
        %1247 = vmatpush1.msra.mxu0 0.0
        %1248 = vmatprep.subr.mxu0 0.0
        %1249 = vmatpush1.msra.mxu0 0.0
        %1250 = vmatprep.subr.mxu0 0.0
        %1251 = vmatpush1.msra.mxu0 0.0
        %1252 = vmatprep.subr.mxu0 0.0
        %1253 = vmatpush1.msra.mxu0 0.0
        %1254 = vmatprep.subr.mxu0 0.0
        %1255 = vmatpush1.msra.mxu0 0.0
        %1256 = vmatprep.subr.mxu0 0.0
        %1257 = vmatpush1.msra.mxu0 0.0
        %1258 = vmatprep.subr.mxu0 0.0
        %1259 = vmatpush1.msra.mxu0 0.0
        %1260 = vmatprep.subr.mxu0 0.0
        %1261 = vmatpush1.msra.mxu0 0.0
        %1262 = vmatprep.subr.mxu0 0.0
        %1263 = vmatpush1.msra.mxu0 0.0
        %1264 = vmatprep.subr.mxu0 0.0
        %1265 = vmatpush1.msra.mxu0 0.0
        %1266 = vmatprep.subr.mxu0 0.0
        %1267 = vmatpush1.msra.mxu0 0.0
        %1268 = vmatprep.subr.mxu0 0.0
        %1269 = vmatpush1.msra.mxu0 0.0
        %1270 = vmatprep.subr.mxu0 0.0
        %1271 = vmatpush1.msra.mxu0 0.0
        %1272 = vmatprep.subr.mxu0 0.0
        %1273 = vmatpush1.msra.mxu0 0.0
        %1274 = vmatprep.subr.mxu0 0.0
        %1275 = vmatpush1.msra.mxu0 0.0
        %1276 = vmatprep.subr.mxu0 0.0
        %1277 = vmatpush1.msra.mxu0 0.0
        %1278 = vmatprep.subr.mxu0 0.0
        %1279 = vmatpush1.msra.mxu0 0.0
        %1280 = vmatprep.subr.mxu0 0.0
        %1281 = vmatpush1.msra.mxu0 0.0
        %1282 = vmatprep.subr.mxu0 0.0
        %1283 = vmatpush1.msra.mxu0 0.0
        %1284 = vmatprep.subr.mxu0 0.0
        %1285 = vmatpush1.msra.mxu0 0.0
        %1286 = vmatprep.subr.mxu0 0.0
        %1287 = vmatpush1.msra.mxu0 0.0
        %1288 = vmatprep.subr.mxu0 0.0
        %1289 = vmatpush1.msra.mxu0 0.0
        %1290 = vmatprep.subr.mxu0 0.0
        %1291 = vmatpush1.msra.mxu0 0.0
        %1292 = vmatprep.subr.mxu0 0.0
        %1293 = vmatpush1.msra.mxu0 0.0
        %1294 = vmatprep.subr.mxu0 0.0
        %1295 = vmatpush1.msra.mxu0 0.0
        %1296 = vmatprep.subr.mxu0 0.0
        %1297 = vmatpush1.msra.mxu0 0.0
        %1298 = vmatprep.subr.mxu0 0.0
        %1299 = vmatpush1.msra.mxu0 0.0
        %1300 = vmatprep.subr.mxu0 0.0
        %1301 = vmatpush1.msra.mxu0 0.0
        %1302 = vmatprep.subr.mxu0 0.0
        %1303 = vmatpush1.msra.mxu0 0.0
        %1304 = vmatprep.subr.mxu0 0.0
        %1305 = vmatpush1.msra.mxu0 0.0
        %1306 = vmatprep.mubr.f32.mxu0 0.0
        %1307 = vmatmul.mubr.f32.gmra.mrb[0].mxu0 %v1237
        %v1308 = vpop.f32.mrb[0].mxu0
        %v1309 = vadd.f32 0.0, %v1308
        %v1310 = vpop.f32.mrb[0].mxu0
        %1311 = vmatprep.mubr.f32.mxu0 0.0
        %1312 = vmatmul.mubr.f32.gmra.mrb[0].mxu0 %v1240
        %v1313 = vpop.f32.mrb[0].mxu0
        %v1314 = vadd.f32 0.0, %v1313
        %v1315 = vpop.f32.mrb[0].mxu0
        %1316 = vdwg.mxu0
        %1317 = vxpose.xlu0.b32.start [1/16] %v1309, 128
        %1318 = vxpose.xlu0.b32.cont [2/16] %v1314, 128
        %1319 = vxpose.xlu0.b32.cont [3/16] 0.0, 128
        %1320 = vxpose.xlu0.b32.cont [4/16] 0.0, 128
        %1321 = vxpose.xlu0.b32.cont [5/16] 0.0, 128
        %1322 = vxpose.xlu0.b32.cont [6/16] 0.0, 128
        %1323 = vxpose.xlu0.b32.cont [7/16] 0.0, 128
        %1324 = vxpose.xlu0.b32.cont [8/16] 0.0, 128
        %1325 = vxpose.xlu0.b32.cont [9/16] 0.0, 128
        %1326 = vxpose.xlu0.b32.cont [10/16] 0.0, 128
        %1327 = vxpose.xlu0.b32.cont [11/16] 0.0, 128
        %1328 = vxpose.xlu0.b32.cont [12/16] 0.0, 128
        %1329 = vxpose.xlu0.b32.cont [13/16] 0.0, 128
        %1330 = vxpose.xlu0.b32.cont [14/16] 0.0, 128
        %1331 = vxpose.xlu0.b32.cont [15/16] 0.0, 128
        %1332 = vxpose.xlu0.b32.end [16/16] 0.0, 128
        %v1333 = vpop.trf.xlu0
        %v1334 = vpop.trf.xlu0
        %v1335 = vpop.trf.xlu0
        %v1336 = vpop.trf.xlu0
        %v1337 = vpop.trf.xlu0
        %v1338 = vpop.trf.xlu0
        %v1339 = vpop.trf.xlu0
        %v1340 = vpop.trf.xlu0
        %v1341 = vpop.trf.xlu0
        %v1342 = vpop.trf.xlu0
        %v1343 = vpop.trf.xlu0
        %v1344 = vpop.trf.xlu0
        %v1345 = vpop.trf.xlu0
        %v1346 = vpop.trf.xlu0
        %v1347 = vpop.trf.xlu0
        %v1348 = vpop.trf.xlu0
        %1350 = vset.pattern.permute.xlu0 1
        %1351 = vperm.xlu0 %1350, %v1309
        %v1352 = vpop.permute.xlu0 %1351
        %1355 = vset.pattern.permute.xlu0 1
        %1356 = vperm.xlu0 %1355, %v1314
        %v1357 = vpop.permute.xlu0 %1356
        %v1359 = vlaneseq
        %v1360 = vshrl.u32 %v1359, 7
        %v1361 = vsub.s32 0, %v1360
        %v1362 = vrot.slane %v1333, %v1361
        %v1363 = vadd.f32 %v1352, %v1362
        %v1364 = vadd.f32 %v1357, %v1362
        %vm1365 = vcmp.gt.f32.partialorder %v1363, 0.0
        %vm1366 = vcmp.gt.f32.partialorder %v1364, 0.0
        %v1367 = vmul.f32 %v1363, 0.2
        %v1368 = vmul.f32 %v1364, 0.2
        %v1369 = vsel %vm1365, %v1363, %v1367
        %v1370 = vsel %vm1366, %v1364, %v1368
        %v1371 = vadd.f32 %v1369, %v247
        %v1372 = vadd.f32 %v1370, %v248
        %v1373 = vsel %vm287, %v1371, -inf
        %1374 = vmax.xlane.f32.xlu0 %v1373
        %v1375 = vpop.xlane.xlu0 %1374
        %v1376 = vsel %vm287, %v1372, -inf
        %1377 = vmax.xlane.f32.xlu0 %v1376
        %v1378 = vpop.xlane.xlu0 %1377
        %v1379 = vsub.f32 %v1371, %v1375
        %v1380 = vsub.f32 %v1372, %v1378
        %v1381 = vmul.f32 %v1379, 1.442695
        %v1382 = vpow.pop %v1381
        %v1383 = vmul.f32 %v1380, 1.442695
        %v1384 = vpow.pop %v1383
        %v1385 = vsel %vm287, %v1382, 0.0
        %1386 = vadd.xlane.f32.xlu0 %v1385
        %v1387 = vpop.xlane.xlu0 %1386
        %v1388 = vsel %vm287, %v1384, 0.0
        %1389 = vadd.xlane.f32.xlu0 %v1388
        %v1390 = vpop.xlane.xlu0 %1389
        %v1391 = vrcp.pop %v1387
        %v1392 = vrcp.pop %v1390
        %v1393 = vmul.f32 %v1382, %v1391
        %v1394 = vmul.f32 %v1384, %v1392
        %v1395 = vlaneseq
        %v1396 = vshrl.u32 %v1395, 7
        %v1397 = vsub.s32 0, %v1396
        %v1398 = vrot.slane %v278, %v1397
        %v1400 = vsel %vm287, %v1393, 0
        %v1403 = vsel %vm287, %v1394, 0
        %1405 = vmatprep.subr.mxu0 0.0
        %1406 = vmatpush1.msra.mxu0 %v1227
        %1407 = vmatprep.subr.mxu0 0.0
        %1408 = vmatpush1.msra.mxu0 %v1232
        %1409 = vmatprep.subr.mxu0 0.0
        %1410 = vmatpush1.msra.mxu0 0.0
        %1411 = vmatprep.subr.mxu0 0.0
        %1412 = vmatpush1.msra.mxu0 0.0
        %1413 = vmatprep.subr.mxu0 0.0
        %1414 = vmatpush1.msra.mxu0 0.0
        %1415 = vmatprep.subr.mxu0 0.0
        %1416 = vmatpush1.msra.mxu0 0.0
        %1417 = vmatprep.subr.mxu0 0.0
        %1418 = vmatpush1.msra.mxu0 0.0
        %1419 = vmatprep.subr.mxu0 0.0
        %1420 = vmatpush1.msra.mxu0 0.0
        %1421 = vmatprep.subr.mxu0 0.0
        %1422 = vmatpush1.msra.mxu0 0.0
        %1423 = vmatprep.subr.mxu0 0.0
        %1424 = vmatpush1.msra.mxu0 0.0
        %1425 = vmatprep.subr.mxu0 0.0
        %1426 = vmatpush1.msra.mxu0 0.0
        %1427 = vmatprep.subr.mxu0 0.0
        %1428 = vmatpush1.msra.mxu0 0.0
        %1429 = vmatprep.subr.mxu0 0.0
        %1430 = vmatpush1.msra.mxu0 0.0
        %1431 = vmatprep.subr.mxu0 0.0
        %1432 = vmatpush1.msra.mxu0 0.0
        %1433 = vmatprep.subr.mxu0 0.0
        %1434 = vmatpush1.msra.mxu0 0.0
        %1435 = vmatprep.subr.mxu0 0.0
        %1436 = vmatpush1.msra.mxu0 0.0
        %1437 = vmatprep.subr.mxu0 0.0
        %1438 = vmatpush1.msra.mxu0 0.0
        %1439 = vmatprep.subr.mxu0 0.0
        %1440 = vmatpush1.msra.mxu0 0.0
        %1441 = vmatprep.subr.mxu0 0.0
        %1442 = vmatpush1.msra.mxu0 0.0
        %1443 = vmatprep.subr.mxu0 0.0
        %1444 = vmatpush1.msra.mxu0 0.0
        %1445 = vmatprep.subr.mxu0 0.0
        %1446 = vmatpush1.msra.mxu0 0.0
        %1447 = vmatprep.subr.mxu0 0.0
        %1448 = vmatpush1.msra.mxu0 0.0
        %1449 = vmatprep.subr.mxu0 0.0
        %1450 = vmatpush1.msra.mxu0 0.0
        %1451 = vmatprep.subr.mxu0 0.0
        %1452 = vmatpush1.msra.mxu0 0.0
        %1453 = vmatprep.subr.mxu0 0.0
        %1454 = vmatpush1.msra.mxu0 0.0
        %1455 = vmatprep.subr.mxu0 0.0
        %1456 = vmatpush1.msra.mxu0 0.0
        %1457 = vmatprep.subr.mxu0 0.0
        %1458 = vmatpush1.msra.mxu0 0.0
        %1459 = vmatprep.subr.mxu0 0.0
        %1460 = vmatpush1.msra.mxu0 0.0
        %1461 = vmatprep.subr.mxu0 0.0
        %1462 = vmatpush1.msra.mxu0 0.0
        %1463 = vmatprep.subr.mxu0 0.0
        %1464 = vmatpush1.msra.mxu0 0.0
        %1465 = vmatprep.subr.mxu0 0.0
        %1466 = vmatpush1.msra.mxu0 0.0
        %1467 = vmatprep.subr.mxu0 0.0
        %1468 = vmatpush1.msra.mxu0 0.0
        %1469 = vmatprep.mubr.f32.mxu0 0.0
        %1470 = vmatmul.mubr.f32.gmra.mrb[0].mxu0 %v1400
        %v1471 = vpop.f32.mrb[0].mxu0
        %v1472 = vadd.f32 %v1398, %v1471
        %v1473 = vpop.f32.mrb[0].mxu0
        %1474 = vmatprep.mubr.f32.mxu0 0.0
        %1475 = vmatmul.mubr.f32.gmra.mrb[0].mxu0 %v1403
        %v1476 = vpop.f32.mrb[0].mxu0
        %v1477 = vadd.f32 %v1398, %v1476
        %v1478 = vpop.f32.mrb[0].mxu0
        %1479 = vdwg.mxu0
        %v1481 = vsel %vm287, %v279, 0
        %v1484 = vsel %vm287, %v280, 0
        %v1487 = vsel %vm287, %v281, 0
        %1489 = vmatprep.subr.mxu0 0.0
        %1490 = vmatpush1.msra.mxu0 %v1472
        %1491 = vmatprep.subr.mxu0 0.0
        %1492 = vmatpush1.msra.mxu0 %v1477
        %1493 = vmatprep.subr.mxu0 0.0
        %1494 = vmatpush1.msra.mxu0 0.0
        %1495 = vmatprep.subr.mxu0 0.0
        %1496 = vmatpush1.msra.mxu0 0.0
        %1497 = vmatprep.subr.mxu0 0.0
        %1498 = vmatpush1.msra.mxu0 0.0
        %1499 = vmatprep.subr.mxu0 0.0
        %1500 = vmatpush1.msra.mxu0 0.0
        %1501 = vmatprep.subr.mxu0 0.0
        %1502 = vmatpush1.msra.mxu0 0.0
        %1503 = vmatprep.subr.mxu0 0.0
        %1504 = vmatpush1.msra.mxu0 0.0
        %1505 = vmatprep.subr.mxu0 0.0
        %1506 = vmatpush1.msra.mxu0 0.0
        %1507 = vmatprep.subr.mxu0 0.0
        %1508 = vmatpush1.msra.mxu0 0.0
        %1509 = vmatprep.subr.mxu0 0.0
        %1510 = vmatpush1.msra.mxu0 0.0
        %1511 = vmatprep.subr.mxu0 0.0
        %1512 = vmatpush1.msra.mxu0 0.0
        %1513 = vmatprep.subr.mxu0 0.0
        %1514 = vmatpush1.msra.mxu0 0.0
        %1515 = vmatprep.subr.mxu0 0.0
        %1516 = vmatpush1.msra.mxu0 0.0
        %1517 = vmatprep.subr.mxu0 0.0
        %1518 = vmatpush1.msra.mxu0 0.0
        %1519 = vmatprep.subr.mxu0 0.0
        %1520 = vmatpush1.msra.mxu0 0.0
        %1521 = vmatprep.subr.mxu0 0.0
        %1522 = vmatpush1.msra.mxu0 0.0
        %1523 = vmatprep.subr.mxu0 0.0
        %1524 = vmatpush1.msra.mxu0 0.0
        %1525 = vmatprep.subr.mxu0 0.0
        %1526 = vmatpush1.msra.mxu0 0.0
        %1527 = vmatprep.subr.mxu0 0.0
        %1528 = vmatpush1.msra.mxu0 0.0
        %1529 = vmatprep.subr.mxu0 0.0
        %1530 = vmatpush1.msra.mxu0 0.0
        %1531 = vmatprep.subr.mxu0 0.0
        %1532 = vmatpush1.msra.mxu0 0.0
        %1533 = vmatprep.subr.mxu0 0.0
        %1534 = vmatpush1.msra.mxu0 0.0
        %1535 = vmatprep.subr.mxu0 0.0
        %1536 = vmatpush1.msra.mxu0 0.0
        %1537 = vmatprep.subr.mxu0 0.0
        %1538 = vmatpush1.msra.mxu0 0.0
        %1539 = vmatprep.subr.mxu0 0.0
        %1540 = vmatpush1.msra.mxu0 0.0
        %1541 = vmatprep.subr.mxu0 0.0
        %1542 = vmatpush1.msra.mxu0 0.0
        %1543 = vmatprep.subr.mxu0 0.0
        %1544 = vmatpush1.msra.mxu0 0.0
        %1545 = vmatprep.subr.mxu0 0.0
        %1546 = vmatpush1.msra.mxu0 0.0
        %1547 = vmatprep.subr.mxu0 0.0
        %1548 = vmatpush1.msra.mxu0 0.0
        %1549 = vmatprep.subr.mxu0 0.0
        %1550 = vmatpush1.msra.mxu0 0.0
        %1551 = vmatprep.subr.mxu0 0.0
        %1552 = vmatpush1.msra.mxu0 0.0
        %1553 = vmatprep.mubr.f32.mxu0 0.0
        %1554 = vmatmul.mubr.f32.gmra.mrb[0].mxu0 %v1481
        %v1555 = vpop.f32.mrb[0].mxu0
        %v1556 = vadd.f32 0.0, %v1555
        %v1557 = vpop.f32.mrb[0].mxu0
        %1558 = vmatprep.mubr.f32.mxu0 0.0
        %1559 = vmatmul.mubr.f32.gmra.mrb[0].mxu0 %v1484
        %v1560 = vpop.f32.mrb[0].mxu0
        %v1561 = vadd.f32 0.0, %v1560
        %v1562 = vpop.f32.mrb[0].mxu0
        %1563 = vmatprep.mubr.f32.mxu0 0.0
        %1564 = vmatmul.mubr.f32.gmra.mrb[0].mxu0 %v1487
        %v1565 = vpop.f32.mrb[0].mxu0
        %v1566 = vadd.f32 0.0, %v1565
        %v1567 = vpop.f32.mrb[0].mxu0
        %1568 = vdwg.mxu0
        %v1569 = vlaneseq
        %v1570 = vshrl.u32 %v1569, 7
        %v1571 = vsub.s32 0, %v1570
        %v1572 = vrot.slane %v283, %v1571
        %v1574 = vsel %vm1235, %v1556, 0
        %v1577 = vsel %vm1235, %v1561, 0
        %v1580 = vsel %vm1235, %v1566, 0
        %1582 = vmatprep.subr.mxu0 0.0
        %1583 = vmatpush1.msra.mxu0 %v282
        %1584 = vmatprep.subr.mxu0 0.0
        %1585 = vmatpush1.msra.mxu0 0.0
        %1586 = vmatprep.subr.mxu0 0.0
        %1587 = vmatpush1.msra.mxu0 0.0
        %1588 = vmatprep.subr.mxu0 0.0
        %1589 = vmatpush1.msra.mxu0 0.0
        %1590 = vmatprep.subr.mxu0 0.0
        %1591 = vmatpush1.msra.mxu0 0.0
        %1592 = vmatprep.subr.mxu0 0.0
        %1593 = vmatpush1.msra.mxu0 0.0
        %1594 = vmatprep.subr.mxu0 0.0
        %1595 = vmatpush1.msra.mxu0 0.0
        %1596 = vmatprep.subr.mxu0 0.0
        %1597 = vmatpush1.msra.mxu0 0.0
        %1598 = vmatprep.subr.mxu0 0.0
        %1599 = vmatpush1.msra.mxu0 0.0
        %1600 = vmatprep.subr.mxu0 0.0
        %1601 = vmatpush1.msra.mxu0 0.0
        %1602 = vmatprep.subr.mxu0 0.0
        %1603 = vmatpush1.msra.mxu0 0.0
        %1604 = vmatprep.subr.mxu0 0.0
        %1605 = vmatpush1.msra.mxu0 0.0
        %1606 = vmatprep.subr.mxu0 0.0
        %1607 = vmatpush1.msra.mxu0 0.0
        %1608 = vmatprep.subr.mxu0 0.0
        %1609 = vmatpush1.msra.mxu0 0.0
        %1610 = vmatprep.subr.mxu0 0.0
        %1611 = vmatpush1.msra.mxu0 0.0
        %1612 = vmatprep.subr.mxu0 0.0
        %1613 = vmatpush1.msra.mxu0 0.0
        %1614 = vmatprep.subr.mxu0 0.0
        %1615 = vmatpush1.msra.mxu0 0.0
        %1616 = vmatprep.subr.mxu0 0.0
        %1617 = vmatpush1.msra.mxu0 0.0
        %1618 = vmatprep.subr.mxu0 0.0
        %1619 = vmatpush1.msra.mxu0 0.0
        %1620 = vmatprep.subr.mxu0 0.0
        %1621 = vmatpush1.msra.mxu0 0.0
        %1622 = vmatprep.subr.mxu0 0.0
        %1623 = vmatpush1.msra.mxu0 0.0
        %1624 = vmatprep.subr.mxu0 0.0
        %1625 = vmatpush1.msra.mxu0 0.0
        %1626 = vmatprep.subr.mxu0 0.0
        %1627 = vmatpush1.msra.mxu0 0.0
        %1628 = vmatprep.subr.mxu0 0.0
        %1629 = vmatpush1.msra.mxu0 0.0
        %1630 = vmatprep.subr.mxu0 0.0
        %1631 = vmatpush1.msra.mxu0 0.0
        %1632 = vmatprep.subr.mxu0 0.0
        %1633 = vmatpush1.msra.mxu0 0.0
        %1634 = vmatprep.subr.mxu0 0.0
        %1635 = vmatpush1.msra.mxu0 0.0
        %1636 = vmatprep.subr.mxu0 0.0
        %1637 = vmatpush1.msra.mxu0 0.0
        %1638 = vmatprep.subr.mxu0 0.0
        %1639 = vmatpush1.msra.mxu0 0.0
        %1640 = vmatprep.subr.mxu0 0.0
        %1641 = vmatpush1.msra.mxu0 0.0
        %1642 = vmatprep.subr.mxu0 0.0
        %1643 = vmatpush1.msra.mxu0 0.0
        %1644 = vmatprep.subr.mxu0 0.0
        %1645 = vmatpush1.msra.mxu0 0.0
        %1646 = vmatprep.mubr.f32.mxu0 0.0
        %1647 = vmatmul.mubr.f32.gmra.mrb[0].mxu0 %v1574
        %v1648 = vpop.f32.mrb[0].mxu0
        %v1649 = vadd.f32 %v1572, %v1648
        %v1650 = vpop.f32.mrb[0].mxu0
        %1651 = vmatprep.mubr.f32.mxu0 0.0
        %1652 = vmatmul.mubr.f32.gmra.mrb[0].mxu0 %v1577
        %v1653 = vpop.f32.mrb[0].mxu0
        %v1654 = vadd.f32 %v1572, %v1653
        %v1655 = vpop.f32.mrb[0].mxu0
        %1656 = vmatprep.mubr.f32.mxu0 0.0
        %1657 = vmatmul.mubr.f32.gmra.mrb[0].mxu0 %v1580
        %v1658 = vpop.f32.mrb[0].mxu0
        %v1659 = vadd.f32 %v1572, %v1658
        %v1660 = vpop.f32.mrb[0].mxu0
        %1661 = vdwg.mxu0
        %v1662 = vmax.f32 %v1649, 0.0
        %v1663 = vmax.f32 %v1654, 0.0
        %v1664 = vmax.f32 %v1659, 0.0
        %v1665 = vlaneseq
        %v1666 = vshrl.u32 %v1665, 7
        %v1667 = vsub.s32 0, %v1666
        %v1668 = vrot.slane %v286, %v1667
        %v1670 = vsel %vm287, %v1662, 0
        %v1673 = vsel %vm287, %v1663, 0
        %v1676 = vsel %vm287, %v1664, 0
        %1678 = vmatprep.subr.mxu0 0.0
        %1679 = vmatpush1.msra.mxu0 %v284
        %1680 = vmatprep.subr.mxu0 0.0
        %1681 = vmatpush1.msra.mxu0 %v285
        %1682 = vmatprep.subr.mxu0 0.0
        %1683 = vmatpush1.msra.mxu0 0.0
        %1684 = vmatprep.subr.mxu0 0.0
        %1685 = vmatpush1.msra.mxu0 0.0
        %1686 = vmatprep.subr.mxu0 0.0
        %1687 = vmatpush1.msra.mxu0 0.0
        %1688 = vmatprep.subr.mxu0 0.0
        %1689 = vmatpush1.msra.mxu0 0.0
        %1690 = vmatprep.subr.mxu0 0.0
        %1691 = vmatpush1.msra.mxu0 0.0
        %1692 = vmatprep.subr.mxu0 0.0
        %1693 = vmatpush1.msra.mxu0 0.0
        %1694 = vmatprep.subr.mxu0 0.0
        %1695 = vmatpush1.msra.mxu0 0.0
        %1696 = vmatprep.subr.mxu0 0.0
        %1697 = vmatpush1.msra.mxu0 0.0
        %1698 = vmatprep.subr.mxu0 0.0
        %1699 = vmatpush1.msra.mxu0 0.0
        %1700 = vmatprep.subr.mxu0 0.0
        %1701 = vmatpush1.msra.mxu0 0.0
        %1702 = vmatprep.subr.mxu0 0.0
        %1703 = vmatpush1.msra.mxu0 0.0
        %1704 = vmatprep.subr.mxu0 0.0
        %1705 = vmatpush1.msra.mxu0 0.0
        %1706 = vmatprep.subr.mxu0 0.0
        %1707 = vmatpush1.msra.mxu0 0.0
        %1708 = vmatprep.subr.mxu0 0.0
        %1709 = vmatpush1.msra.mxu0 0.0
        %1710 = vmatprep.subr.mxu0 0.0
        %1711 = vmatpush1.msra.mxu0 0.0
        %1712 = vmatprep.subr.mxu0 0.0
        %1713 = vmatpush1.msra.mxu0 0.0
        %1714 = vmatprep.subr.mxu0 0.0
        %1715 = vmatpush1.msra.mxu0 0.0
        %1716 = vmatprep.subr.mxu0 0.0
        %1717 = vmatpush1.msra.mxu0 0.0
        %1718 = vmatprep.subr.mxu0 0.0
        %1719 = vmatpush1.msra.mxu0 0.0
        %1720 = vmatprep.subr.mxu0 0.0
        %1721 = vmatpush1.msra.mxu0 0.0
        %1722 = vmatprep.subr.mxu0 0.0
        %1723 = vmatpush1.msra.mxu0 0.0
        %1724 = vmatprep.subr.mxu0 0.0
        %1725 = vmatpush1.msra.mxu0 0.0
        %1726 = vmatprep.subr.mxu0 0.0
        %1727 = vmatpush1.msra.mxu0 0.0
        %1728 = vmatprep.subr.mxu0 0.0
        %1729 = vmatpush1.msra.mxu0 0.0
        %1730 = vmatprep.subr.mxu0 0.0
        %1731 = vmatpush1.msra.mxu0 0.0
        %1732 = vmatprep.subr.mxu0 0.0
        %1733 = vmatpush1.msra.mxu0 0.0
        %1734 = vmatprep.subr.mxu0 0.0
        %1735 = vmatpush1.msra.mxu0 0.0
        %1736 = vmatprep.subr.mxu0 0.0
        %1737 = vmatpush1.msra.mxu0 0.0
        %1738 = vmatprep.subr.mxu0 0.0
        %1739 = vmatpush1.msra.mxu0 0.0
        %1740 = vmatprep.subr.mxu0 0.0
        %1741 = vmatpush1.msra.mxu0 0.0
        %1742 = vmatprep.mubr.f32.mxu0 0.0
        %1743 = vmatmul.mubr.f32.gmra.mrb[0].mxu0 %v1670
        %v1744 = vpop.f32.mrb[0].mxu0
        %v1745 = vadd.f32 %v1668, %v1744
        %v1746 = vpop.f32.mrb[0].mxu0
        %1747 = vmatprep.mubr.f32.mxu0 0.0
        %1748 = vmatmul.mubr.f32.gmra.mrb[0].mxu0 %v1673
        %v1749 = vpop.f32.mrb[0].mxu0
        %v1750 = vadd.f32 %v1668, %v1749
        %v1751 = vpop.f32.mrb[0].mxu0
        %1752 = vmatprep.mubr.f32.mxu0 0.0
        %1753 = vmatmul.mubr.f32.gmra.mrb[0].mxu0 %v1676
        %v1754 = vpop.f32.mrb[0].mxu0
        %v1755 = vadd.f32 %v1668, %v1754
        %v1756 = vpop.f32.mrb[0].mxu0
        %1757 = vdwg.mxu0
        %1758 = vst [vmem:[%s244] sm:$0xff] %v1745
        %1759 = vst [vmem:[%s244 + $0x8] sm:$0xff] %v1750
        %1760 = vst [vmem:[%s244 + $0x10] sm:$0x1] %v1755
        %p1761 = scmp.lt.s32.totalorder %s20, 3
        %s1762 = scalar_select %p1761, %s20, 3
        %s1763 = smul.addr %s1762, 3
        %s1764 = smul.addr %s1763, 8
        %s1765 = scalar_lea.vmem %s3, %s1764
        // Predicated region
        $region45: #{multitask_gat_forward.1} parent=31 // pred_check
          %p1766 = pneg %p111
        $region46: #{multitask_gat_forward.1} parent=31 // pred_check_branch
          %1768 = sbr.rel (%p1766) target = $region48
        $region47: #{multitask_gat_forward.1} parent=31 // pred_region
          _
        $region48: #{multitask_gat_forward.1} parent=31 // pred_fallthru
          _
      $region32: #{multitask_gat_forward.1} parent=5 // pred_fallthru
        _
      %p1769 = scmp.le.s32.totalorder 2, %s15
      // Predicated region
      $region49: #{multitask_gat_forward.1} parent=5 // pred_check
        %p1770 = pneg %p1769
      $region50: #{multitask_gat_forward.1} parent=5 // pred_check_branch
        %1772 = sbr.rel (%p1770) target = $region52
      $region51: #{multitask_gat_forward.1} parent=5 // pred_region
        %s1773 = ssub.s32 %s15, 2
        // Predicated region
        $region53: #{multitask_gat_forward.1} parent=51 // pred_check
          %p1774 = pneg %p117
        $region54: #{multitask_gat_forward.1} parent=51 // pred_check_branch
          %1776 = sbr.rel (%p1774) target = $region56
        $region55: #{multitask_gat_forward.1} parent=51 // pred_region
          %p1777 = scmp.lt.s32.totalorder %s21, 3
          %s1778 = scalar_select %p1777, %s21, 3
          %s1779 = smul.addr %s1778, 3
          %s1780 = smul.addr %s1779, 8
          %s1781 = scalar_lea.vmem %s3, %s1780
        $region56: #{multitask_gat_forward.1} parent=51 // pred_fallthru
          _
      $region52: #{multitask_gat_forward.1} parent=5 // pred_fallthru
        _
    $region6: #{multitask_gat_forward.1} parent=1 // loop_footer
      %s19 = sadd.s32 1, %s15
    $region7: #{multitask_gat_forward.1} parent=1 // loop_footer_branch
      %14 = sbr.rel target = $region3
    $region8: #{multitask_gat_forward.1} parent=1 // loop_exit
      _
    %1782 = vsyncpa [#allocation3], 1
    %s1783 = scalar_lea.sflag [#allocation3], 1
    %1784 = vsyncpa %s1783, 1
    %1785 = vsyncpa [#allocation5], 1
    %s1786 = scalar_lea.sflag [#allocation5], 1
    %1787 = vsyncpa %s1786, 1

</llo_original>
